<compile_context>
chip_gen: v5e
topology: v5e:2x2
jax: 0.10.0
libtpu: 0.0.40
codegen_flags: <defaults>
</compile_context>

<pallas_src>
import functools

import jax
import jax.numpy as jnp
from jax.experimental import pallas as pl
from jax.experimental.pallas import tpu as pltpu


def _round_up(x, m):
    return (x + m - 1) // m * m


def _double_conv_kernel(Wr, NOUT, LEAD,
                        x_ref, mask_ref, w1_ref, s1_ref, b1_ref,
                        w2_ref, s2_ref, b2_ref, o_ref, mid_ref):
    """Fused (conv3x3 -> BN -> ReLU) x 2 for one group of Nb batched images.

    Layout: images sit back-to-back on the lane axis in row-major padded form
    (row stride Wr).  Output anchor lane q corresponds to image pixel
    (y, x) = ((q % SEG)//Wr, (q % SEG)%Wr) of image b = q // SEG; the 3x3 tap
    (dy, dx) of that anchor is input lane q + dy*Wr + dx.  So each tap of the
    conv is a single contiguous lane-shifted slice -> 9 accumulating matmuls.

    x_ref:    (1, Cin_p, NTOT)    bf16  padded/flattened batched input slab
    mask_ref: (1, NOUT)           f32   1.0 on lanes that are real output pixels
    w1_ref:   (9, Cmid_p, Cin_p)  bf16  per-tap conv1 weights
    s1_ref:   (Cmid_p, 1)         f32   BN1 scale (gamma/sqrt(var+eps))
    b1_ref:   (Cmid_p, 1)         f32   folded conv1-bias + BN1 shift
    w2_ref:   (9, Cout_p, Cmid_p) bf16
    s2_ref:   (Cout_p, 1)         f32
    b2_ref:   (Cout_p, 1)         f32
    o_ref:    (1, Cout_p, NOUT)   bf16  (garbage lanes sliced off in the wrapper)
    mid_ref:  (Cmid_p, NOUT+2*LEAD) bf16 VMEM scratch: padded mid activation,
              interior stored at lane offset LEAD (128-aligned full-vreg stores)
    """
    def conv3x3(w_ref, load, base_off):
        acc = None
        for t in range(9):
            dy, dx = t // 3, t % 3
            src = load(base_off + dy * Wr + dx)              # (Cin, NOUT) bf16
            d = jnp.dot(w_ref[t], src, preferred_element_type=jnp.float32)
            acc = d if acc is None else acc + d
        return acc                                            # (Cout, NOUT) f32

    # ---------------- stage 1: conv3x3 + BN (scale/shift) + ReLU ----------------
    acc1 = conv3x3(w1_ref, lambda off: x_ref[0, :, off:off + NOUT], 0)
    y = jnp.maximum(acc1 * s1_ref[...] + b1_ref[...], 0.0) * mask_ref[...]

    # Zero only the two halo guard strips of the padded mid buffer (cheap; redone
    # every step so megacore-split grids stay correct), then one lane-aligned
    # full-width store of the interior.
    cmid = mid_ref.shape[0]
    nmid = mid_ref.shape[1]
    mid_ref[:, 0:LEAD] = jnp.zeros((cmid, LEAD), mid_ref.dtype)
    mid_ref[:, LEAD + NOUT:nmid] = jnp.zeros((cmid, nmid - LEAD - NOUT), mid_ref.dtype)
    mid_ref[:, LEAD:LEAD + NOUT] = y.astype(mid_ref.dtype)

    # ---------------- stage 2: conv3x3 + BN (scale/shift) + ReLU ----------------
    # The mid value at padded position p lives at mid_ref lane p + LEAD - (Wr+1).
    acc2 = conv3x3(w2_ref, lambda off: mid_ref[:, off:off + NOUT], LEAD - Wr - 1)
    z = jnp.maximum(acc2 * s2_ref[...] + b2_ref[...], 0.0)
    o_ref[0] = z.astype(o_ref.dtype)                          # lane-dense bf16 store


def _fold_conv_bn(w_oihw, conv_bias, bn, cin_p, cout_p, eps=1e-5):
    """Per-tap bf16 weights (9, cout_p, cin_p); BN kept as f32 scale + shift."""
    cout, cin = w_oihw.shape[0], w_oihw.shape[1]
    w = jnp.transpose(w_oihw, (2, 3, 0, 1)).reshape(9, cout, cin)     # (tap, O, I)
    w = jnp.pad(w, ((0, 0), (0, cout_p - cout), (0, cin_p - cin))).astype(jnp.bfloat16)
    scale = bn["gamma"] / jnp.sqrt(bn["var"] + eps)                   # (Cout,)
    bias = (conv_bias - bn["mean"]) * scale + bn["beta"]
    scale = jnp.pad(scale, (0, cout_p - cout)).astype(jnp.float32).reshape(cout_p, 1)
    bias = jnp.pad(bias, (0, cout_p - cout)).astype(jnp.float32).reshape(cout_p, 1)
    return w, scale, bias


@jax.jit
def double_conv_forward(x_nchw, params):
    """PyTorch-facing entry: NCHW in, NCHW out (eval-mode DoubleConv). bf16 out."""
    N, Cin, H, W = x_nchw.shape
    Cmid = params["w1"].shape[0]
    Cout = params["w2"].shape[0]

    # Sublane-granularity channel padding (>= 8, multiple of 8).
    Cin_p = max(8, _round_up(Cin, 8))
    Cmid_p = max(8, _round_up(Cmid, 8))
    Cout_p = max(8, _round_up(Cout, 8))

    # Shared padded-image layout for both conv stages.
    Wr = W + 2                                # padded row stride
    SEG = (H + 2) * Wr                        # per-image padded segment
    Nb = min(N, 8)                            # images batched per grid step
    G = pl.cdiv(N, Nb)
    NOUT = _round_up(Nb * SEG, 256)           # per-step lane width (256-wide MXUs)
    NTOT = _round_up(NOUT + 2 * Wr + 2, 128)  # input slab + tap guard
    LEAD = _round_up(Wr + 1, 128)             # 128-aligned halo guard of mid buffer
    NMID = NOUT + 2 * LEAD

    w1, s1, b1 = _fold_conv_bn(params["w1"], params["b1"], params["bn1"], Cin_p, Cmid_p)
    w2, s2, b2 = _fold_conv_bn(params["w2"], params["b2"], params["bn2"], Cmid_p, Cout_p)

    # Zero-padded, flattened, batch-concatenated bf16 input slab.
    xb = x_nchw.astype(jnp.bfloat16)
    xb = jnp.pad(xb, ((0, G * Nb - N), (0, Cin_p - Cin), (1, 1), (1, Wr - W - 1)))
    xb = xb.reshape(G, Nb, Cin_p, SEG).transpose(0, 2, 1, 3).reshape(G, Cin_p, Nb * SEG)
    xb = jnp.pad(xb, ((0, 0), (0, 0), (0, NTOT - Nb * SEG)))

    # Mask of lanes that correspond to a real output pixel of some image.
    q = jnp.arange(NOUT, dtype=jnp.int32)
    rem = q % SEG
    mask = ((q < Nb * SEG) & (rem // Wr < H) & (rem % Wr < W))
    mask = mask.astype(jnp.float32).reshape(1, NOUT)

    # Rough VMEM footprint; only raise the scoped limit when actually needed.
    vmem_est = (2 * Cin_p * NTOT * 2 + 2 * Cout_p * NOUT * 2 + Cmid_p * NMID * 2
                + NOUT * 4 + 9 * (Cmid_p * Cin_p + Cout_p * Cmid_p) * 2
                + (Cmid_p + Cout_p) * 8)
    vmem_limit = None
    if vmem_est * 2 > 32 * 1024 * 1024:
        vmem_limit = min(int(vmem_est * 2), 96 * 1024 * 1024)

    out = pl.pallas_call(
        functools.partial(_double_conv_kernel, Wr, NOUT, LEAD),
        out_shape=jax.ShapeDtypeStruct((G, Cout_p, NOUT), jnp.bfloat16),
        grid_spec=pltpu.PrefetchScalarGridSpec(
            num_scalar_prefetch=0,
            grid=(G,),
            in_specs=[
                pl.BlockSpec((1, Cin_p, NTOT), lambda g: (g, 0, 0)),
                pl.BlockSpec((1, NOUT), lambda g: (0, 0)),
                pl.BlockSpec((9, Cmid_p, Cin_p), lambda g: (0, 0, 0)),
                pl.BlockSpec((Cmid_p, 1), lambda g: (0, 0)),
                pl.BlockSpec((Cmid_p, 1), lambda g: (0, 0)),
                pl.BlockSpec((9, Cout_p, Cmid_p), lambda g: (0, 0, 0)),
                pl.BlockSpec((Cout_p, 1), lambda g: (0, 0)),
                pl.BlockSpec((Cout_p, 1), lambda g: (0, 0)),
            ],
            out_specs=pl.BlockSpec((1, Cout_p, NOUT), lambda g: (g, 0, 0)),
            scratch_shapes=[pltpu.VMEM((Cmid_p, NMID), jnp.bfloat16)],
        ),
        compiler_params=pltpu.CompilerParams(
            dimension_semantics=("parallel",),
            vmem_limit_bytes=vmem_limit),
    )(xb, mask, w1, s1, b1, w2, s2, b2)

    # Extract the interior pixels (drop halo rows / pad columns / pad channels).
    out = out[:, :Cout, :Nb * SEG].reshape(G, Cout, Nb, H + 2, Wr)
    out = out[:, :, :, :H, :W].transpose(0, 2, 1, 3, 4).reshape(G * Nb, Cout, H, W)
    return out[:N]                            # bf16 NCHW


def init_double_conv_params(key, in_channels, out_channels, mid_channels=None):
    if not mid_channels:
        mid_channels = out_channels
    k = jax.random.split(key, 4)

    def conv_params(kw, kb, cin, cout):
        fan_in = cin * 3 * 3
        bound = 1.0 / jnp.sqrt(fan_in)
        w = jax.random.uniform(kw, (cout, cin, 3, 3), jnp.float32, -bound, bound)  # OIHW
        b = jax.random.uniform(kb, (cout,), jnp.float32, -bound, bound)
        return w, b

    w1, b1 = conv_params(k[0], k[1], in_channels, mid_channels)
    w2, b2 = conv_params(k[2], k[3], mid_channels, out_channels)

    def bn_params(c):
        return dict(gamma=jnp.ones((c,), jnp.float32),
                    beta=jnp.zeros((c,), jnp.float32),
                    mean=jnp.zeros((c,), jnp.float32),
                    var=jnp.ones((c,), jnp.float32))

    return dict(w1=w1, b1=b1, bn1=bn_params(mid_channels),
                w2=w2, b2=b2, bn2=bn_params(out_channels))


def _reference_double_conv(x_nchw, params, eps=1e-5):
    """Independent pure-JAX f32 reference matching eval-mode PyTorch DoubleConv."""
    def stage(x, w_oihw, b, bn):
        y = jax.lax.conv_general_dilated(
            x, w_oihw, window_strides=(1, 1), padding=((1, 1), (1, 1)),
            dimension_numbers=("NCHW", "OIHW", "NCHW"))
        y = y + b[None, :, None, None]
        scale = bn["gamma"] / jnp.sqrt(bn["var"] + eps)
        y = (y - bn["mean"][None, :, None, None]) * scale[None, :, None, None] \
            + bn["beta"][None, :, None, None]
        return jnp.maximum(y, 0.0)

    y = stage(x_nchw, params["w1"], params["b1"], params["bn1"])
    return stage(y, params["w2"], params["b2"], params["bn2"])


if __name__ == "__main__":
    key = jax.random.PRNGKey(0)
    k_x, k_p = jax.random.split(key)

    N, C_in, H, W = 2, 4, 16, 16
    C_out = 8  # mid_channels defaults to out_channels

    x = jax.random.normal(k_x, (N, C_in, H, W), jnp.float32)
    params = init_double_conv_params(k_p, C_in, C_out)

    out = double_conv_forward(x, params)
    out = jax.block_until_ready(out)

    ref = _reference_double_conv(x, params)
    assert out.shape == (N, C_out, H, W)
    # Tolerance covers bf16 activations/weights (f32 MXU accumulation) + bf16 output.
    assert jnp.allclose(out.astype(jnp.float32), ref, atol=5e-2, rtol=5e-2), \
        float(jnp.max(jnp.abs(out.astype(jnp.float32) - ref)))

    print("KERNEL_OK")
</pallas_src>

<mosaic_0001>
module attributes {stable_mosaic.version = 11 : i64} {
  func.func @_double_conv_kernel(%arg0: i32, %arg1: memref<1x8x896xbf16, #tpu.memory_space<vmem>>, %arg2: memref<1x768xf32, #tpu.memory_space<vmem>>, %arg3: memref<9x8x8xbf16, #tpu.memory_space<vmem>>, %arg4: memref<8x1xf32, #tpu.memory_space<vmem>>, %arg5: memref<8x1xf32, #tpu.memory_space<vmem>>, %arg6: memref<9x8x8xbf16, #tpu.memory_space<vmem>>, %arg7: memref<8x1xf32, #tpu.memory_space<vmem>>, %arg8: memref<8x1xf32, #tpu.memory_space<vmem>>, %arg9: memref<1x8x768xbf16, #tpu.memory_space<vmem>>, %arg10: memref<8x1024xbf16, #tpu.memory_space<vmem>>) attributes {dimension_semantics = [#tpu.dimension_semantics<parallel>], iteration_bounds = array<i64: 1>, scalar_prefetch = 0 : i64, scratch_operands = 1 : i64, tpu.core_type = #tpu.core_type<tc>, window_params = [{transform_indices = @transform_0, window_bounds = array<i64: 1, 8, 896>}, {pipeline_mode = #tpu.pipeline_mode<synchronous>, transform_indices = @transform_1, window_bounds = array<i64: 1, 768>}, {pipeline_mode = #tpu.pipeline_mode<synchronous>, transform_indices = @transform_2, window_bounds = array<i64: 9, 8, 8>}, {pipeline_mode = #tpu.pipeline_mode<synchronous>, transform_indices = @transform_3, window_bounds = array<i64: 8, 1>}, {pipeline_mode = #tpu.pipeline_mode<synchronous>, transform_indices = @transform_4, window_bounds = array<i64: 8, 1>}, {pipeline_mode = #tpu.pipeline_mode<synchronous>, transform_indices = @transform_5, window_bounds = array<i64: 9, 8, 8>}, {pipeline_mode = #tpu.pipeline_mode<synchronous>, transform_indices = @transform_6, window_bounds = array<i64: 8, 1>}, {pipeline_mode = #tpu.pipeline_mode<synchronous>, transform_indices = @transform_7, window_bounds = array<i64: 8, 1>}, {transform_indices = @transform_8, window_bounds = array<i64: 1, 8, 768>}]} {
    %c0 = arith.constant 0 : index
    %c0_0 = arith.constant 0 : index
    %c0_1 = arith.constant 0 : index
    %0 = vector.load %arg1[%c0, %c0_0, %c0_1] : memref<1x8x896xbf16, #tpu.memory_space<vmem>>, vector<1x8x768xbf16>
    %1 = vector.shape_cast %0 : vector<1x8x768xbf16> to vector<8x768xbf16>
    %c0_2 = arith.constant 0 : index
    %c0_3 = arith.constant 0 : index
    %c0_4 = arith.constant 0 : index
    %2 = vector.load %arg3[%c0_2, %c0_3, %c0_4] : memref<9x8x8xbf16, #tpu.memory_space<vmem>>, vector<1x8x8xbf16>
    %3 = vector.shape_cast %2 : vector<1x8x8xbf16> to vector<8x8xbf16>
    %cst = arith.constant dense<0.000000e+00> : vector<8x768xf32>
    %4 = tpu.matmul %3, %1, %cst {dimension_numbers = #tpu.dot_dimension_numbers<[1], [0], [0], [1], [0, 0, 1, 1], [], []>} : vector<8x8xbf16>, vector<8x768xbf16>, vector<8x768xf32> -> vector<8x768xf32>
    %c0_5 = arith.constant 0 : index
    %c0_6 = arith.constant 0 : index
    %c1 = arith.constant 1 : index
    %5 = vector.load %arg1[%c0_5, %c0_6, %c1] : memref<1x8x896xbf16, #tpu.memory_space<vmem>>, vector<1x8x768xbf16>
    %6 = vector.shape_cast %5 : vector<1x8x768xbf16> to vector<8x768xbf16>
    %c1_7 = arith.constant 1 : index
    %c0_8 = arith.constant 0 : index
    %c0_9 = arith.constant 0 : index
    %7 = vector.load %arg3[%c1_7, %c0_8, %c0_9] : memref<9x8x8xbf16, #tpu.memory_space<vmem>>, vector<1x8x8xbf16>
    %8 = vector.shape_cast %7 : vector<1x8x8xbf16> to vector<8x8xbf16>
    %cst_10 = arith.constant dense<0.000000e+00> : vector<8x768xf32>
    %9 = tpu.matmul %8, %6, %cst_10 {dimension_numbers = #tpu.dot_dimension_numbers<[1], [0], [0], [1], [0, 0, 1, 1], [], []>} : vector<8x8xbf16>, vector<8x768xbf16>, vector<8x768xf32> -> vector<8x768xf32>
    %10 = arith.addf %4, %9 : vector<8x768xf32>
    %c0_11 = arith.constant 0 : index
    %c0_12 = arith.constant 0 : index
    %c2 = arith.constant 2 : index
    %11 = vector.load %arg1[%c0_11, %c0_12, %c2] : memref<1x8x896xbf16, #tpu.memory_space<vmem>>, vector<1x8x768xbf16>
    %12 = vector.shape_cast %11 : vector<1x8x768xbf16> to vector<8x768xbf16>
    %c2_13 = arith.constant 2 : index
    %c0_14 = arith.constant 0 : index
    %c0_15 = arith.constant 0 : index
    %13 = vector.load %arg3[%c2_13, %c0_14, %c0_15] : memref<9x8x8xbf16, #tpu.memory_space<vmem>>, vector<1x8x8xbf16>
    %14 = vector.shape_cast %13 : vector<1x8x8xbf16> to vector<8x8xbf16>
    %cst_16 = arith.constant dense<0.000000e+00> : vector<8x768xf32>
    %15 = tpu.matmul %14, %12, %cst_16 {dimension_numbers = #tpu.dot_dimension_numbers<[1], [0], [0], [1], [0, 0, 1, 1], [], []>} : vector<8x8xbf16>, vector<8x768xbf16>, vector<8x768xf32> -> vector<8x768xf32>
    %16 = arith.addf %10, %15 : vector<8x768xf32>
    %c0_17 = arith.constant 0 : index
    %c0_18 = arith.constant 0 : index
    %c18 = arith.constant 18 : index
    %17 = vector.load %arg1[%c0_17, %c0_18, %c18] : memref<1x8x896xbf16, #tpu.memory_space<vmem>>, vector<1x8x768xbf16>
    %18 = vector.shape_cast %17 : vector<1x8x768xbf16> to vector<8x768xbf16>
    %c3 = arith.constant 3 : index
    %c0_19 = arith.constant 0 : index
    %c0_20 = arith.constant 0 : index
    %19 = vector.load %arg3[%c3, %c0_19, %c0_20] : memref<9x8x8xbf16, #tpu.memory_space<vmem>>, vector<1x8x8xbf16>
    %20 = vector.shape_cast %19 : vector<1x8x8xbf16> to vector<8x8xbf16>
    %cst_21 = arith.constant dense<0.000000e+00> : vector<8x768xf32>
    %21 = tpu.matmul %20, %18, %cst_21 {dimension_numbers = #tpu.dot_dimension_numbers<[1], [0], [0], [1], [0, 0, 1, 1], [], []>} : vector<8x8xbf16>, vector<8x768xbf16>, vector<8x768xf32> -> vector<8x768xf32>
    %22 = arith.addf %16, %21 : vector<8x768xf32>
    %c0_22 = arith.constant 0 : index
    %c0_23 = arith.constant 0 : index
    %c19 = arith.constant 19 : index
    %23 = vector.load %arg1[%c0_22, %c0_23, %c19] : memref<1x8x896xbf16, #tpu.memory_space<vmem>>, vector<1x8x768xbf16>
    %24 = vector.shape_cast %23 : vector<1x8x768xbf16> to vector<8x768xbf16>
    %c4 = arith.constant 4 : index
    %c0_24 = arith.constant 0 : index
    %c0_25 = arith.constant 0 : index
    %25 = vector.load %arg3[%c4, %c0_24, %c0_25] : memref<9x8x8xbf16, #tpu.memory_space<vmem>>, vector<1x8x8xbf16>
    %26 = vector.shape_cast %25 : vector<1x8x8xbf16> to vector<8x8xbf16>
    %cst_26 = arith.constant dense<0.000000e+00> : vector<8x768xf32>
    %27 = tpu.matmul %26, %24, %cst_26 {dimension_numbers = #tpu.dot_dimension_numbers<[1], [0], [0], [1], [0, 0, 1, 1], [], []>} : vector<8x8xbf16>, vector<8x768xbf16>, vector<8x768xf32> -> vector<8x768xf32>
    %28 = arith.addf %22, %27 : vector<8x768xf32>
    %c0_27 = arith.constant 0 : index
    %c0_28 = arith.constant 0 : index
    %c20 = arith.constant 20 : index
    %29 = vector.load %arg1[%c0_27, %c0_28, %c20] : memref<1x8x896xbf16, #tpu.memory_space<vmem>>, vector<1x8x768xbf16>
    %30 = vector.shape_cast %29 : vector<1x8x768xbf16> to vector<8x768xbf16>
    %c5 = arith.constant 5 : index
    %c0_29 = arith.constant 0 : index
    %c0_30 = arith.constant 0 : index
    %31 = vector.load %arg3[%c5, %c0_29, %c0_30] : memref<9x8x8xbf16, #tpu.memory_space<vmem>>, vector<1x8x8xbf16>
    %32 = vector.shape_cast %31 : vector<1x8x8xbf16> to vector<8x8xbf16>
    %cst_31 = arith.constant dense<0.000000e+00> : vector<8x768xf32>
    %33 = tpu.matmul %32, %30, %cst_31 {dimension_numbers = #tpu.dot_dimension_numbers<[1], [0], [0], [1], [0, 0, 1, 1], [], []>} : vector<8x8xbf16>, vector<8x768xbf16>, vector<8x768xf32> -> vector<8x768xf32>
    %34 = arith.addf %28, %33 : vector<8x768xf32>
    %c0_32 = arith.constant 0 : index
    %c0_33 = arith.constant 0 : index
    %c36 = arith.constant 36 : index
    %35 = vector.load %arg1[%c0_32, %c0_33, %c36] : memref<1x8x896xbf16, #tpu.memory_space<vmem>>, vector<1x8x768xbf16>
    %36 = vector.shape_cast %35 : vector<1x8x768xbf16> to vector<8x768xbf16>
    %c6 = arith.constant 6 : index
    %c0_34 = arith.constant 0 : index
    %c0_35 = arith.constant 0 : index
    %37 = vector.load %arg3[%c6, %c0_34, %c0_35] : memref<9x8x8xbf16, #tpu.memory_space<vmem>>, vector<1x8x8xbf16>
    %38 = vector.shape_cast %37 : vector<1x8x8xbf16> to vector<8x8xbf16>
    %cst_36 = arith.constant dense<0.000000e+00> : vector<8x768xf32>
    %39 = tpu.matmul %38, %36, %cst_36 {dimension_numbers = #tpu.dot_dimension_numbers<[1], [0], [0], [1], [0, 0, 1, 1], [], []>} : vector<8x8xbf16>, vector<8x768xbf16>, vector<8x768xf32> -> vector<8x768xf32>
    %40 = arith.addf %34, %39 : vector<8x768xf32>
    %c0_37 = arith.constant 0 : index
    %c0_38 = arith.constant 0 : index
    %c37 = arith.constant 37 : index
    %41 = vector.load %arg1[%c0_37, %c0_38, %c37] : memref<1x8x896xbf16, #tpu.memory_space<vmem>>, vector<1x8x768xbf16>
    %42 = vector.shape_cast %41 : vector<1x8x768xbf16> to vector<8x768xbf16>
    %c7 = arith.constant 7 : index
    %c0_39 = arith.constant 0 : index
    %c0_40 = arith.constant 0 : index
    %43 = vector.load %arg3[%c7, %c0_39, %c0_40] : memref<9x8x8xbf16, #tpu.memory_space<vmem>>, vector<1x8x8xbf16>
    %44 = vector.shape_cast %43 : vector<1x8x8xbf16> to vector<8x8xbf16>
    %cst_41 = arith.constant dense<0.000000e+00> : vector<8x768xf32>
    %45 = tpu.matmul %44, %42, %cst_41 {dimension_numbers = #tpu.dot_dimension_numbers<[1], [0], [0], [1], [0, 0, 1, 1], [], []>} : vector<8x8xbf16>, vector<8x768xbf16>, vector<8x768xf32> -> vector<8x768xf32>
    %46 = arith.addf %40, %45 : vector<8x768xf32>
    %c0_42 = arith.constant 0 : index
    %c0_43 = arith.constant 0 : index
    %c38 = arith.constant 38 : index
    %47 = vector.load %arg1[%c0_42, %c0_43, %c38] : memref<1x8x896xbf16, #tpu.memory_space<vmem>>, vector<1x8x768xbf16>
    %48 = vector.shape_cast %47 : vector<1x8x768xbf16> to vector<8x768xbf16>
    %c8 = arith.constant 8 : index
    %c0_44 = arith.constant 0 : index
    %c0_45 = arith.constant 0 : index
    %49 = vector.load %arg3[%c8, %c0_44, %c0_45] : memref<9x8x8xbf16, #tpu.memory_space<vmem>>, vector<1x8x8xbf16>
    %50 = vector.shape_cast %49 : vector<1x8x8xbf16> to vector<8x8xbf16>
    %cst_46 = arith.constant dense<0.000000e+00> : vector<8x768xf32>
    %51 = tpu.matmul %50, %48, %cst_46 {dimension_numbers = #tpu.dot_dimension_numbers<[1], [0], [0], [1], [0, 0, 1, 1], [], []>} : vector<8x8xbf16>, vector<8x768xbf16>, vector<8x768xf32> -> vector<8x768xf32>
    %52 = arith.addf %46, %51 : vector<8x768xf32>
    %c0_47 = arith.constant 0 : index
    %c0_48 = arith.constant 0 : index
    %53 = vector.load %arg4[%c0_47, %c0_48] : memref<8x1xf32, #tpu.memory_space<vmem>>, vector<8x1xf32>
    %54 = vector.broadcast %53 : vector<8x1xf32> to vector<8x768xf32>
    %55 = arith.mulf %52, %54 : vector<8x768xf32>
    %c0_49 = arith.constant 0 : index
    %c0_50 = arith.constant 0 : index
    %56 = vector.load %arg5[%c0_49, %c0_50] : memref<8x1xf32, #tpu.memory_space<vmem>>, vector<8x1xf32>
    %57 = vector.broadcast %56 : vector<8x1xf32> to vector<8x768xf32>
    %58 = arith.addf %55, %57 : vector<8x768xf32>
    %cst_51 = arith.constant 0.000000e+00 : f32
    %59 = vector.broadcast %cst_51 : f32 to vector<8x768xf32>
    %60 = arith.maximumf %58, %59 : vector<8x768xf32>
    %c0_52 = arith.constant 0 : index
    %c0_53 = arith.constant 0 : index
    %61 = vector.load %arg2[%c0_52, %c0_53] : memref<1x768xf32, #tpu.memory_space<vmem>>, vector<1x768xf32>
    %62 = vector.broadcast %61 : vector<1x768xf32> to vector<8x768xf32>
    %63 = arith.mulf %60, %62 : vector<8x768xf32>
    %cst_54 = arith.constant 0.000000e+00 : bf16
    %64 = vector.broadcast %cst_54 : bf16 to vector<8x128xbf16>
    %c0_55 = arith.constant 0 : index
    %c0_56 = arith.constant 0 : index
    %65 = vector.load %arg10[%c0_55, %c0_56] : memref<8x1024xbf16, #tpu.memory_space<vmem>>, vector<8x128xbf16>
    tpu.vector_store %arg10[%c0_55, %c0_56], %64 {strides = array<i32>} : memref<8x1024xbf16, #tpu.memory_space<vmem>>, vector<8x128xbf16>,
    %cst_57 = arith.constant 0.000000e+00 : bf16
    %66 = vector.broadcast %cst_57 : bf16 to vector<8x128xbf16>
    %c0_58 = arith.constant 0 : index
    %c896 = arith.constant 896 : index
    %67 = vector.load %arg10[%c0_58, %c896] : memref<8x1024xbf16, #tpu.memory_space<vmem>>, vector<8x128xbf16>
    tpu.vector_store %arg10[%c0_58, %c896], %66 {strides = array<i32>} : memref<8x1024xbf16, #tpu.memory_space<vmem>>, vector<8x128xbf16>,
    %68 = arith.truncf %63 : vector<8x768xf32> to vector<8x768xbf16>
    %c0_59 = arith.constant 0 : index
    %c128 = arith.constant 128 : index
    %69 = vector.load %arg10[%c0_59, %c128] : memref<8x1024xbf16, #tpu.memory_space<vmem>>, vector<8x768xbf16>
    tpu.vector_store %arg10[%c0_59, %c128], %68 {strides = array<i32>} : memref<8x1024xbf16, #tpu.memory_space<vmem>>, vector<8x768xbf16>,
    %c0_60 = arith.constant 0 : index
    %c109 = arith.constant 109 : index
    %70 = vector.load %arg10[%c0_60, %c109] : memref<8x1024xbf16, #tpu.memory_space<vmem>>, vector<8x768xbf16>
    %c0_61 = arith.constant 0 : index
    %c0_62 = arith.constant 0 : index
    %c0_63 = arith.constant 0 : index
    %71 = vector.load %arg6[%c0_61, %c0_62, %c0_63] : memref<9x8x8xbf16, #tpu.memory_space<vmem>>, vector<1x8x8xbf16>
    %72 = vector.shape_cast %71 : vector<1x8x8xbf16> to vector<8x8xbf16>
    %cst_64 = arith.constant dense<0.000000e+00> : vector<8x768xf32>
    %73 = tpu.matmul %72, %70, %cst_64 {dimension_numbers = #tpu.dot_dimension_numbers<[1], [0], [0], [1], [0, 0, 1, 1], [], []>} : vector<8x8xbf16>, vector<8x768xbf16>, vector<8x768xf32> -> vector<8x768xf32>
    %c0_65 = arith.constant 0 : index
    %c110 = arith.constant 110 : index
    %74 = vector.load %arg10[%c0_65, %c110] : memref<8x1024xbf16, #tpu.memory_space<vmem>>, vector<8x768xbf16>
    %c1_66 = arith.constant 1 : index
    %c0_67 = arith.constant 0 : index
    %c0_68 = arith.constant 0 : index
    %75 = vector.load %arg6[%c1_66, %c0_67, %c0_68] : memref<9x8x8xbf16, #tpu.memory_space<vmem>>, vector<1x8x8xbf16>
    %76 = vector.shape_cast %75 : vector<1x8x8xbf16> to vector<8x8xbf16>
    %cst_69 = arith.constant dense<0.000000e+00> : vector<8x768xf32>
    %77 = tpu.matmul %76, %74, %cst_69 {dimension_numbers = #tpu.dot_dimension_numbers<[1], [0], [0], [1], [0, 0, 1, 1], [], []>} : vector<8x8xbf16>, vector<8x768xbf16>, vector<8x768xf32> -> vector<8x768xf32>
    %78 = arith.addf %73, %77 : vector<8x768xf32>
    %c0_70 = arith.constant 0 : index
    %c111 = arith.constant 111 : index
    %79 = vector.load %arg10[%c0_70, %c111] : memref<8x1024xbf16, #tpu.memory_space<vmem>>, vector<8x768xbf16>
    %c2_71 = arith.constant 2 : index
    %c0_72 = arith.constant 0 : index
    %c0_73 = arith.constant 0 : index
    %80 = vector.load %arg6[%c2_71, %c0_72, %c0_73] : memref<9x8x8xbf16, #tpu.memory_space<vmem>>, vector<1x8x8xbf16>
    %81 = vector.shape_cast %80 : vector<1x8x8xbf16> to vector<8x8xbf16>
    %cst_74 = arith.constant dense<0.000000e+00> : vector<8x768xf32>
    %82 = tpu.matmul %81, %79, %cst_74 {dimension_numbers = #tpu.dot_dimension_numbers<[1], [0], [0], [1], [0, 0, 1, 1], [], []>} : vector<8x8xbf16>, vector<8x768xbf16>, vector<8x768xf32> -> vector<8x768xf32>
    %83 = arith.addf %78, %82 : vector<8x768xf32>
    %c0_75 = arith.constant 0 : index
    %c127 = arith.constant 127 : index
    %84 = vector.load %arg10[%c0_75, %c127] : memref<8x1024xbf16, #tpu.memory_space<vmem>>, vector<8x768xbf16>
    %c3_76 = arith.constant 3 : index
    %c0_77 = arith.constant 0 : index
    %c0_78 = arith.constant 0 : index
    %85 = vector.load %arg6[%c3_76, %c0_77, %c0_78] : memref<9x8x8xbf16, #tpu.memory_space<vmem>>, vector<1x8x8xbf16>
    %86 = vector.shape_cast %85 : vector<1x8x8xbf16> to vector<8x8xbf16>
    %cst_79 = arith.constant dense<0.000000e+00> : vector<8x768xf32>
    %87 = tpu.matmul %86, %84, %cst_79 {dimension_numbers = #tpu.dot_dimension_numbers<[1], [0], [0], [1], [0, 0, 1, 1], [], []>} : vector<8x8xbf16>, vector<8x768xbf16>, vector<8x768xf32> -> vector<8x768xf32>
    %88 = arith.addf %83, %87 : vector<8x768xf32>
    %c0_80 = arith.constant 0 : index
    %c128_81 = arith.constant 128 : index
    %89 = vector.load %arg10[%c0_80, %c128_81] : memref<8x1024xbf16, #tpu.memory_space<vmem>>, vector<8x768xbf16>
    %c4_82 = arith.constant 4 : index
    %c0_83 = arith.constant 0 : index
    %c0_84 = arith.constant 0 : index
    %90 = vector.load %arg6[%c4_82, %c0_83, %c0_84] : memref<9x8x8xbf16, #tpu.memory_space<vmem>>, vector<1x8x8xbf16>
    %91 = vector.shape_cast %90 : vector<1x8x8xbf16> to vector<8x8xbf16>
    %cst_85 = arith.constant dense<0.000000e+00> : vector<8x768xf32>
    %92 = tpu.matmul %91, %89, %cst_85 {dimension_numbers = #tpu.dot_dimension_numbers<[1], [0], [0], [1], [0, 0, 1, 1], [], []>} : vector<8x8xbf16>, vector<8x768xbf16>, vector<8x768xf32> -> vector<8x768xf32>
    %93 = arith.addf %88, %92 : vector<8x768xf32>
    %c0_86 = arith.constant 0 : index
    %c129 = arith.constant 129 : index
    %94 = vector.load %arg10[%c0_86, %c129] : memref<8x1024xbf16, #tpu.memory_space<vmem>>, vector<8x768xbf16>
    %c5_87 = arith.constant 5 : index
    %c0_88 = arith.constant 0 : index
    %c0_89 = arith.constant 0 : index
    %95 = vector.load %arg6[%c5_87, %c0_88, %c0_89] : memref<9x8x8xbf16, #tpu.memory_space<vmem>>, vector<1x8x8xbf16>
    %96 = vector.shape_cast %95 : vector<1x8x8xbf16> to vector<8x8xbf16>
    %cst_90 = arith.constant dense<0.000000e+00> : vector<8x768xf32>
    %97 = tpu.matmul %96, %94, %cst_90 {dimension_numbers = #tpu.dot_dimension_numbers<[1], [0], [0], [1], [0, 0, 1, 1], [], []>} : vector<8x8xbf16>, vector<8x768xbf16>, vector<8x768xf32> -> vector<8x768xf32>
    %98 = arith.addf %93, %97 : vector<8x768xf32>
    %c0_91 = arith.constant 0 : index
    %c145 = arith.constant 145 : index
    %99 = vector.load %arg10[%c0_91, %c145] : memref<8x1024xbf16, #tpu.memory_space<vmem>>, vector<8x768xbf16>
    %c6_92 = arith.constant 6 : index
    %c0_93 = arith.constant 0 : index
    %c0_94 = arith.constant 0 : index
    %100 = vector.load %arg6[%c6_92, %c0_93, %c0_94] : memref<9x8x8xbf16, #tpu.memory_space<vmem>>, vector<1x8x8xbf16>
    %101 = vector.shape_cast %100 : vector<1x8x8xbf16> to vector<8x8xbf16>
    %cst_95 = arith.constant dense<0.000000e+00> : vector<8x768xf32>
    %102 = tpu.matmul %101, %99, %cst_95 {dimension_numbers = #tpu.dot_dimension_numbers<[1], [0], [0], [1], [0, 0, 1, 1], [], []>} : vector<8x8xbf16>, vector<8x768xbf16>, vector<8x768xf32> -> vector<8x768xf32>
    %103 = arith.addf %98, %102 : vector<8x768xf32>
    %c0_96 = arith.constant 0 : index
    %c146 = arith.constant 146 : index
    %104 = vector.load %arg10[%c0_96, %c146] : memref<8x1024xbf16, #tpu.memory_space<vmem>>, vector<8x768xbf16>
    %c7_97 = arith.constant 7 : index
    %c0_98 = arith.constant 0 : index
    %c0_99 = arith.constant 0 : index
    %105 = vector.load %arg6[%c7_97, %c0_98, %c0_99] : memref<9x8x8xbf16, #tpu.memory_space<vmem>>, vector<1x8x8xbf16>
    %106 = vector.shape_cast %105 : vector<1x8x8xbf16> to vector<8x8xbf16>
    %cst_100 = arith.constant dense<0.000000e+00> : vector<8x768xf32>
    %107 = tpu.matmul %106, %104, %cst_100 {dimension_numbers = #tpu.dot_dimension_numbers<[1], [0], [0], [1], [0, 0, 1, 1], [], []>} : vector<8x8xbf16>, vector<8x768xbf16>, vector<8x768xf32> -> vector<8x768xf32>
    %108 = arith.addf %103, %107 : vector<8x768xf32>
    %c0_101 = arith.constant 0 : index
    %c147 = arith.constant 147 : index
    %109 = vector.load %arg10[%c0_101, %c147] : memref<8x1024xbf16, #tpu.memory_space<vmem>>, vector<8x768xbf16>
    %c8_102 = arith.constant 8 : index
    %c0_103 = arith.constant 0 : index
    %c0_104 = arith.constant 0 : index
    %110 = vector.load %arg6[%c8_102, %c0_103, %c0_104] : memref<9x8x8xbf16, #tpu.memory_space<vmem>>, vector<1x8x8xbf16>
    %111 = vector.shape_cast %110 : vector<1x8x8xbf16> to vector<8x8xbf16>
    %cst_105 = arith.constant dense<0.000000e+00> : vector<8x768xf32>
    %112 = tpu.matmul %111, %109, %cst_105 {dimension_numbers = #tpu.dot_dimension_numbers<[1], [0], [0], [1], [0, 0, 1, 1], [], []>} : vector<8x8xbf16>, vector<8x768xbf16>, vector<8x768xf32> -> vector<8x768xf32>
    %113 = arith.addf %108, %112 : vector<8x768xf32>
    %c0_106 = arith.constant 0 : index
    %c0_107 = arith.constant 0 : index
    %114 = vector.load %arg7[%c0_106, %c0_107] : memref<8x1xf32, #tpu.memory_space<vmem>>, vector<8x1xf32>
    %115 = vector.broadcast %114 : vector<8x1xf32> to vector<8x768xf32>
    %116 = arith.mulf %113, %115 : vector<8x768xf32>
    %c0_108 = arith.constant 0 : index
    %c0_109 = arith.constant 0 : index
    %117 = vector.load %arg8[%c0_108, %c0_109] : memref<8x1xf32, #tpu.memory_space<vmem>>, vector<8x1xf32>
    %118 = vector.broadcast %117 : vector<8x1xf32> to vector<8x768xf32>
    %119 = arith.addf %116, %118 : vector<8x768xf32>
    %cst_110 = arith.constant 0.000000e+00 : f32
    %120 = vector.broadcast %cst_110 : f32 to vector<8x768xf32>
    %121 = arith.maximumf %119, %120 : vector<8x768xf32>
    %122 = arith.truncf %121 : vector<8x768xf32> to vector<8x768xbf16>
    %c0_111 = arith.constant 0 : index
    %c0_112 = arith.constant 0 : index
    %c0_113 = arith.constant 0 : index
    %123 = vector.load %arg9[%c0_111, %c0_112, %c0_113] : memref<1x8x768xbf16, #tpu.memory_space<vmem>>, vector<1x8x768xbf16>
    %124 = vector.shape_cast %123 : vector<1x8x768xbf16> to vector<8x768xbf16>
    %125 = vector.shape_cast %122 : vector<8x768xbf16> to vector<1x8x768xbf16>
    tpu.vector_store %arg9[%c0_111, %c0_112, %c0_113], %125 {strides = array<i32>} : memref<1x8x768xbf16, #tpu.memory_space<vmem>>, vector<1x8x768xbf16>,
    return
  }
  func.func @transform_0(%arg0: i32) -> (i32, i32, i32) {
    %c0_i32 = arith.constant 0 : i32
    %c0_i32_0 = arith.constant 0 : i32
    %c0_i32_1 = arith.constant 0 : i32
    return %arg0, %c0_i32, %c0_i32_0 : i32, i32, i32
  }
  func.func @transform_1(%arg0: i32) -> (i32, i32) {
    %c0_i32 = arith.constant 0 : i32
    %c0_i32_0 = arith.constant 0 : i32
    %c0_i32_1 = arith.constant 0 : i32
    return %c0_i32, %c0_i32_0 : i32, i32
  }
  func.func @transform_2(%arg0: i32) -> (i32, i32, i32) {
    %c0_i32 = arith.constant 0 : i32
    %c0_i32_0 = arith.constant 0 : i32
    %c0_i32_1 = arith.constant 0 : i32
    %c0_i32_2 = arith.constant 0 : i32
    return %c0_i32, %c0_i32_0, %c0_i32_1 : i32, i32, i32
  }
  func.func @transform_3(%arg0: i32) -> (i32, i32) {
    %c0_i32 = arith.constant 0 : i32
    %c0_i32_0 = arith.constant 0 : i32
    %c0_i32_1 = arith.constant 0 : i32
    return %c0_i32, %c0_i32_0 : i32, i32
  }
  func.func @transform_4(%arg0: i32) -> (i32, i32) {
    %c0_i32 = arith.constant 0 : i32
    %c0_i32_0 = arith.constant 0 : i32
    %c0_i32_1 = arith.constant 0 : i32
    return %c0_i32, %c0_i32_0 : i32, i32
  }
  func.func @transform_5(%arg0: i32) -> (i32, i32, i32) {
    %c0_i32 = arith.constant 0 : i32
    %c0_i32_0 = arith.constant 0 : i32
    %c0_i32_1 = arith.constant 0 : i32
    %c0_i32_2 = arith.constant 0 : i32
    return %c0_i32, %c0_i32_0, %c0_i32_1 : i32, i32, i32
  }
  func.func @transform_6(%arg0: i32) -> (i32, i32) {
    %c0_i32 = arith.constant 0 : i32
    %c0_i32_0 = arith.constant 0 : i32
    %c0_i32_1 = arith.constant 0 : i32
    return %c0_i32, %c0_i32_0 : i32, i32
  }
  func.func @transform_7(%arg0: i32) -> (i32, i32) {
    %c0_i32 = arith.constant 0 : i32
    %c0_i32_0 = arith.constant 0 : i32
    %c0_i32_1 = arith.constant 0 : i32
    return %c0_i32, %c0_i32_0 : i32, i32
  }
  func.func @transform_8(%arg0: i32) -> (i32, i32, i32) {
    %c0_i32 = arith.constant 0 : i32
    %c0_i32_0 = arith.constant 0 : i32
    %c0_i32_1 = arith.constant 0 : i32
    return %arg0, %c0_i32, %c0_i32_0 : i32, i32, i32
  }
}

</mosaic_0001>

<llo_original>
// kernel: double_conv_forward.1
$region0: #{double_conv_forward.1}
  #allocation0 [shape = 'u32[]', space=smem, size = 0x4, offset = 0x4, fixed_abs, tag = 'smem constant byte address 0x4 - core index']
  #allocation1 [shape = 'u32[72,128]{1,0:T(1,128)}', space=vmem, size = 0x9000, scoped, tag = 'internal scratch']
  #allocation2 [shape = 'bf16[8,1024]{1,0:T(8,128)(2,1)}', space=vmem, size = 0x4000, scoped, tag = 'scratch operand']
  %s0 = inlined_call_operand.vmem [shape: bf16[1,8,896], index: 0, kind: input, shape index: {}]
  %s1 = inlined_call_operand.vmem [shape: f32[1,768], index: 1, kind: input, shape index: {}]
  %s2 = inlined_call_operand.vmem [shape: bf16[9,8,8], index: 2, kind: input, shape index: {}]
  %s3 = inlined_call_operand.vmem [shape: f32[8,1], index: 3, kind: input, shape index: {}]
  %s4 = inlined_call_operand.vmem [shape: f32[8,1], index: 4, kind: input, shape index: {}]
  %s5 = inlined_call_operand.vmem [shape: bf16[9,8,8], index: 5, kind: input, shape index: {}]
  %s6 = inlined_call_operand.vmem [shape: f32[8,1], index: 6, kind: input, shape index: {}]
  %s7 = inlined_call_operand.vmem [shape: f32[8,1], index: 7, kind: input, shape index: {}]
  %s8 = inlined_call_operand.vmem [shape: bf16[1,8,768], index: 8, kind: output, shape index: {}]
  %s9 = sld [smem:[#allocation0]]
  $region42: #{double_conv_forward.1} parent=0
    _
  %s11 = ssub.s32 1, %s9
  %s12 = scalar_select 0, %s11, %s9
  // Predicated region
  $region2: #{double_conv_forward.1} parent=0 // pred_check
    _
  $region3: #{double_conv_forward.1} parent=0 // pred_check_branch
    %14 = sbr.rel (0) target = $region5
  $region4: #{double_conv_forward.1} parent=0 // pred_region
    _
  $region5: #{double_conv_forward.1} parent=0 // pred_fallthru
    _
  // Predicated region
  $region6: #{double_conv_forward.1} parent=0 // pred_check
    _
  $region7: #{double_conv_forward.1} parent=0 // pred_check_branch
    %16 = sbr.rel (0) target = $region9
  $region8: #{double_conv_forward.1} parent=0 // pred_region
    _
  $region9: #{double_conv_forward.1} parent=0 // pred_fallthru
    _
  // Predicated region
  $region10: #{double_conv_forward.1} parent=0 // pred_check
    _
  $region11: #{double_conv_forward.1} parent=0 // pred_check_branch
    %18 = sbr.rel (0) target = $region13
  $region12: #{double_conv_forward.1} parent=0 // pred_region
    _
  $region13: #{double_conv_forward.1} parent=0 // pred_fallthru
    _
  // Predicated region
  $region14: #{double_conv_forward.1} parent=0 // pred_check
    _
  $region15: #{double_conv_forward.1} parent=0 // pred_check_branch
    %20 = sbr.rel (0) target = $region17
  $region16: #{double_conv_forward.1} parent=0 // pred_region
    _
  $region17: #{double_conv_forward.1} parent=0 // pred_fallthru
    _
  // Predicated region
  $region18: #{double_conv_forward.1} parent=0 // pred_check
    _
  $region19: #{double_conv_forward.1} parent=0 // pred_check_branch
    %22 = sbr.rel (0) target = $region21
  $region20: #{double_conv_forward.1} parent=0 // pred_region
    _
  $region21: #{double_conv_forward.1} parent=0 // pred_fallthru
    _
  // Predicated region
  $region22: #{double_conv_forward.1} parent=0 // pred_check
    _
  $region23: #{double_conv_forward.1} parent=0 // pred_check_branch
    %24 = sbr.rel (0) target = $region25
  $region24: #{double_conv_forward.1} parent=0 // pred_region
    _
  $region25: #{double_conv_forward.1} parent=0 // pred_fallthru
    _
  // Predicated region
  $region26: #{double_conv_forward.1} parent=0 // pred_check
    _
  $region27: #{double_conv_forward.1} parent=0 // pred_check_branch
    %26 = sbr.rel (0) target = $region29
  $region28: #{double_conv_forward.1} parent=0 // pred_region
    _
  $region29: #{double_conv_forward.1} parent=0 // pred_fallthru
    _
  // Predicated region
  $region30: #{double_conv_forward.1} parent=0 // pred_check
    _
  $region31: #{double_conv_forward.1} parent=0 // pred_check_branch
    %28 = sbr.rel (0) target = $region33
  $region32: #{double_conv_forward.1} parent=0 // pred_region
    _
  $region33: #{double_conv_forward.1} parent=0 // pred_fallthru
    _
  %v30 = vld [vmem:[%s0] sm:$0xff]
  %v31 = vld [vmem:[%s0 + $0x8] sm:$0xff]
  %v32 = vld [vmem:[%s0 + $0x10] sm:$0xff]
  %v33 = vld [vmem:[%s2] sm:$0xf]
  %v34 = vld [vmem:[%s0] sm:$0xff]
  %v35 = vld [vmem:[%s0 + $0x8] sm:$0xff]
  %v36 = vld [vmem:[%s0 + $0x10] sm:$0xff]
  %v37 = vld [vmem:[%s0 + $0x18] sm:$0xf]
  %s38 = scalar_lea.vmem %s2, 4
  %v39 = vld [vmem:[%s38] sm:$0xf]
  %v44 = vunpack.c.l.b16 %v34
  %v45 = vunpack.c.h.b16 %v34
  %v46 = vunpack.c.l.b16 %v35
  %v47 = vunpack.c.h.b16 %v35
  %v48 = vunpack.c.l.b16 %v36
  %v49 = vunpack.c.h.b16 %v36
  %v50 = vunpack.c.l.b16 %v37
  %v51 = vpack.c.b16 %v44, %v44
  %v52 = vpack.c.b16 %v45, %v45
  %v53 = vpack.c.b16 %v46, %v46
  %v54 = vpack.c.b16 %v47, %v47
  %v55 = vpack.c.b16 %v48, %v48
  %v56 = vpack.c.b16 %v49, %v49
  %v57 = vpack.c.b16 %v50, %v50
  %58 = vrot.lane.b32.xlu0 %v51, 127
  %v59 = vpop.permute.xlu0 %58
  %60 = vrot.lane.b32.xlu0 %v52, 127
  %v61 = vpop.permute.xlu0 %60
  %62 = vrot.lane.b32.xlu0 %v53, 127
  %v63 = vpop.permute.xlu0 %62
  %64 = vrot.lane.b32.xlu0 %v54, 127
  %v65 = vpop.permute.xlu0 %64
  %66 = vrot.lane.b32.xlu0 %v55, 127
  %v67 = vpop.permute.xlu0 %66
  %68 = vrot.lane.b32.xlu0 %v56, 127
  %v69 = vpop.permute.xlu0 %68
  %70 = vrot.lane.b32.xlu0 %v57, 127
  %v71 = vpop.permute.xlu0 %70
  %vm72 = vcmask 1039360
  %v73 = vsel %vm72, %v59, %v61
  %v74 = vsel %vm72, %v61, %v63
  %v75 = vsel %vm72, %v63, %v65
  %v76 = vsel %vm72, %v65, %v67
  %v77 = vsel %vm72, %v67, %v69
  %v78 = vsel %vm72, %v69, %v71
  %vm79 = vcmask 64512
  %v81 = vsel %vm79, %v39, 0
  %vm83 = vcmask 1043456
  %v85 = vsel %vm83, %v73, 0
  %v88 = vsel %vm83, %v74, 0
  %v91 = vsel %vm83, %v75, 0
  %v94 = vsel %vm83, %v76, 0
  %v97 = vsel %vm83, %v77, 0
  %v100 = vsel %vm83, %v78, 0
  %102 = vmatpush.bf16.msra.mxu0 0
  %103 = vmatpush.bf16.msra.mxu0 0
  %104 = vmatpush.bf16.msra.mxu0 0
  %105 = vmatpush.bf16.msra.mxu0 0
  %106 = vmatpush.bf16.msra.mxu0 0
  %107 = vmatpush.bf16.msra.mxu0 0
  %108 = vmatpush.bf16.msra.mxu0 0
  %109 = vmatpush.bf16.msra.mxu0 %v85
  %110 = vmatmul.bf16.gmra.mxu0 %v81
  %v111 = vpop.f32.mrf.mxu0
  %v112 = vadd.f32 0.0, %v111
  %v113 = vpop.f32.mrf.mxu0
  %114 = vdwg.mxu0
  %115 = vmatpush.bf16.msra.mxu0 0
  %116 = vmatpush.bf16.msra.mxu0 0
  %117 = vmatpush.bf16.msra.mxu0 0
  %118 = vmatpush.bf16.msra.mxu0 0
  %119 = vmatpush.bf16.msra.mxu0 0
  %120 = vmatpush.bf16.msra.mxu0 0
  %121 = vmatpush.bf16.msra.mxu0 0
  %122 = vmatpush.bf16.msra.mxu0 %v88
  %123 = vmatmul.bf16.gmra.mxu0 %v81
  %v124 = vpop.f32.mrf.mxu0
  %v125 = vadd.f32 0.0, %v124
  %v126 = vpop.f32.mrf.mxu0
  %127 = vdwg.mxu0
  %128 = vmatpush.bf16.msra.mxu0 0
  %129 = vmatpush.bf16.msra.mxu0 0
  %130 = vmatpush.bf16.msra.mxu0 0
  %131 = vmatpush.bf16.msra.mxu0 0
  %132 = vmatpush.bf16.msra.mxu0 0
  %133 = vmatpush.bf16.msra.mxu0 0
  %134 = vmatpush.bf16.msra.mxu0 0
  %135 = vmatpush.bf16.msra.mxu0 %v91
  %136 = vmatmul.bf16.gmra.mxu0 %v81
  %v137 = vpop.f32.mrf.mxu0
  %v138 = vadd.f32 0.0, %v137
  %v139 = vpop.f32.mrf.mxu0
  %140 = vdwg.mxu0
  %141 = vmatpush.bf16.msra.mxu0 0
  %142 = vmatpush.bf16.msra.mxu0 0
  %143 = vmatpush.bf16.msra.mxu0 0
  %144 = vmatpush.bf16.msra.mxu0 0
  %145 = vmatpush.bf16.msra.mxu0 0
  %146 = vmatpush.bf16.msra.mxu0 0
  %147 = vmatpush.bf16.msra.mxu0 0
  %148 = vmatpush.bf16.msra.mxu0 %v94
  %149 = vmatmul.bf16.gmra.mxu0 %v81
  %v150 = vpop.f32.mrf.mxu0
  %v151 = vadd.f32 0.0, %v150
  %v152 = vpop.f32.mrf.mxu0
  %153 = vdwg.mxu0
  %154 = vmatpush.bf16.msra.mxu0 0
  %155 = vmatpush.bf16.msra.mxu0 0
  %156 = vmatpush.bf16.msra.mxu0 0
  %157 = vmatpush.bf16.msra.mxu0 0
  %158 = vmatpush.bf16.msra.mxu0 0
  %159 = vmatpush.bf16.msra.mxu0 0
  %160 = vmatpush.bf16.msra.mxu0 0
  %161 = vmatpush.bf16.msra.mxu0 %v97
  %162 = vmatmul.bf16.gmra.mxu0 %v81
  %v163 = vpop.f32.mrf.mxu0
  %v164 = vadd.f32 0.0, %v163
  %v165 = vpop.f32.mrf.mxu0
  %166 = vdwg.mxu0
  %167 = vmatpush.bf16.msra.mxu0 0
  %168 = vmatpush.bf16.msra.mxu0 0
  %169 = vmatpush.bf16.msra.mxu0 0
  %170 = vmatpush.bf16.msra.mxu0 0
  %171 = vmatpush.bf16.msra.mxu0 0
  %172 = vmatpush.bf16.msra.mxu0 0
  %173 = vmatpush.bf16.msra.mxu0 0
  %174 = vmatpush.bf16.msra.mxu0 %v100
  %175 = vmatmul.bf16.gmra.mxu0 %v81
  %v176 = vpop.f32.mrf.mxu0
  %v177 = vadd.f32 0.0, %v176
  %v178 = vpop.f32.mrf.mxu0
  %179 = vdwg.mxu0
  %v183 = vunpack.c.l.b16 %v30
  %v184 = vunpack.c.h.b16 %v30
  %v185 = vunpack.c.l.b16 %v31
  %v186 = vunpack.c.h.b16 %v31
  %v187 = vunpack.c.l.b16 %v32
  %v188 = vunpack.c.h.b16 %v32
  %v189 = vpack.c.b16 %v183, %v183
  %v190 = vpack.c.b16 %v184, %v184
  %v191 = vpack.c.b16 %v185, %v185
  %v192 = vpack.c.b16 %v186, %v186
  %v193 = vpack.c.b16 %v187, %v187
  %v194 = vpack.c.b16 %v188, %v188
  %v196 = vsel %vm79, %v33, 0
  %v199 = vsel %vm83, %v189, 0
  %v202 = vsel %vm83, %v190, 0
  %v205 = vsel %vm83, %v191, 0
  %v208 = vsel %vm83, %v192, 0
  %v211 = vsel %vm83, %v193, 0
  %v214 = vsel %vm83, %v194, 0
  %216 = vmatpush.bf16.msra.mxu0 0
  %217 = vmatpush.bf16.msra.mxu0 0
  %218 = vmatpush.bf16.msra.mxu0 0
  %219 = vmatpush.bf16.msra.mxu0 0
  %220 = vmatpush.bf16.msra.mxu0 0
  %221 = vmatpush.bf16.msra.mxu0 0
  %222 = vmatpush.bf16.msra.mxu0 0
  %223 = vmatpush.bf16.msra.mxu0 %v199
  %224 = vmatmul.bf16.gmra.mxu0 %v196
  %v225 = vpop.f32.mrf.mxu0
  %v226 = vadd.f32 %v112, %v225
  %v227 = vpop.f32.mrf.mxu0
  %228 = vdwg.mxu0
  %229 = vmatpush.bf16.msra.mxu0 0
  %230 = vmatpush.bf16.msra.mxu0 0
  %231 = vmatpush.bf16.msra.mxu0 0
  %232 = vmatpush.bf16.msra.mxu0 0
  %233 = vmatpush.bf16.msra.mxu0 0
  %234 = vmatpush.bf16.msra.mxu0 0
  %235 = vmatpush.bf16.msra.mxu0 0
  %236 = vmatpush.bf16.msra.mxu0 %v202
  %237 = vmatmul.bf16.gmra.mxu0 %v196
  %v238 = vpop.f32.mrf.mxu0
  %v239 = vadd.f32 %v125, %v238
  %v240 = vpop.f32.mrf.mxu0
  %241 = vdwg.mxu0
  %242 = vmatpush.bf16.msra.mxu0 0
  %243 = vmatpush.bf16.msra.mxu0 0
  %244 = vmatpush.bf16.msra.mxu0 0
  %245 = vmatpush.bf16.msra.mxu0 0
  %246 = vmatpush.bf16.msra.mxu0 0
  %247 = vmatpush.bf16.msra.mxu0 0
  %248 = vmatpush.bf16.msra.mxu0 0
  %249 = vmatpush.bf16.msra.mxu0 %v205
  %250 = vmatmul.bf16.gmra.mxu0 %v196
  %v251 = vpop.f32.mrf.mxu0
  %v252 = vadd.f32 %v138, %v251
  %v253 = vpop.f32.mrf.mxu0
  %254 = vdwg.mxu0
  %255 = vmatpush.bf16.msra.mxu0 0
  %256 = vmatpush.bf16.msra.mxu0 0
  %257 = vmatpush.bf16.msra.mxu0 0
  %258 = vmatpush.bf16.msra.mxu0 0
  %259 = vmatpush.bf16.msra.mxu0 0
  %260 = vmatpush.bf16.msra.mxu0 0
  %261 = vmatpush.bf16.msra.mxu0 0
  %262 = vmatpush.bf16.msra.mxu0 %v208
  %263 = vmatmul.bf16.gmra.mxu0 %v196
  %v264 = vpop.f32.mrf.mxu0
  %v265 = vadd.f32 %v151, %v264
  %v266 = vpop.f32.mrf.mxu0
  %267 = vdwg.mxu0
  %268 = vmatpush.bf16.msra.mxu0 0
  %269 = vmatpush.bf16.msra.mxu0 0
  %270 = vmatpush.bf16.msra.mxu0 0
  %271 = vmatpush.bf16.msra.mxu0 0
  %272 = vmatpush.bf16.msra.mxu0 0
  %273 = vmatpush.bf16.msra.mxu0 0
  %274 = vmatpush.bf16.msra.mxu0 0
  %275 = vmatpush.bf16.msra.mxu0 %v211
  %276 = vmatmul.bf16.gmra.mxu0 %v196
  %v277 = vpop.f32.mrf.mxu0
  %v278 = vadd.f32 %v164, %v277
  %v279 = vpop.f32.mrf.mxu0
  %280 = vdwg.mxu0
  %281 = vmatpush.bf16.msra.mxu0 0
  %282 = vmatpush.bf16.msra.mxu0 0
  %283 = vmatpush.bf16.msra.mxu0 0
  %284 = vmatpush.bf16.msra.mxu0 0
  %285 = vmatpush.bf16.msra.mxu0 0
  %286 = vmatpush.bf16.msra.mxu0 0
  %287 = vmatpush.bf16.msra.mxu0 0
  %288 = vmatpush.bf16.msra.mxu0 %v214
  %289 = vmatmul.bf16.gmra.mxu0 %v196
  %v290 = vpop.f32.mrf.mxu0
  %v291 = vadd.f32 %v177, %v290
  %v292 = vpop.f32.mrf.mxu0
  %293 = vdwg.mxu0
  %s294 = scalar_lea.vmem %s2, 8
  %v295 = vld [vmem:[%s294] sm:$0xf]
  %296 = vrot.lane.b32.xlu0 %v51, 126
  %v297 = vpop.permute.xlu0 %296
  %298 = vrot.lane.b32.xlu0 %v52, 126
  %v299 = vpop.permute.xlu0 %298
  %300 = vrot.lane.b32.xlu0 %v53, 126
  %v301 = vpop.permute.xlu0 %300
  %302 = vrot.lane.b32.xlu0 %v54, 126
  %v303 = vpop.permute.xlu0 %302
  %304 = vrot.lane.b32.xlu0 %v55, 126
  %v305 = vpop.permute.xlu0 %304
  %306 = vrot.lane.b32.xlu0 %v56, 126
  %v307 = vpop.permute.xlu0 %306
  %308 = vrot.lane.b32.xlu0 %v57, 126
  %v309 = vpop.permute.xlu0 %308
  %vm310 = vcmask 1031168
  %v311 = vsel %vm310, %v297, %v299
  %v312 = vsel %vm310, %v299, %v301
  %v313 = vsel %vm310, %v301, %v303
  %v314 = vsel %vm310, %v303, %v305
  %v315 = vsel %vm310, %v305, %v307
  %v316 = vsel %vm310, %v307, %v309
  %v318 = vsel %vm79, %v295, 0
  %v321 = vsel %vm83, %v311, 0
  %v324 = vsel %vm83, %v312, 0
  %v327 = vsel %vm83, %v313, 0
  %v330 = vsel %vm83, %v314, 0
  %v333 = vsel %vm83, %v315, 0
  %v336 = vsel %vm83, %v316, 0
  %338 = vmatpush.bf16.msra.mxu0 0
  %339 = vmatpush.bf16.msra.mxu0 0
  %340 = vmatpush.bf16.msra.mxu0 0
  %341 = vmatpush.bf16.msra.mxu0 0
  %342 = vmatpush.bf16.msra.mxu0 0
  %343 = vmatpush.bf16.msra.mxu0 0
  %344 = vmatpush.bf16.msra.mxu0 0
  %345 = vmatpush.bf16.msra.mxu0 %v321
  %346 = vmatmul.bf16.gmra.mxu0 %v318
  %v347 = vpop.f32.mrf.mxu0
  %v348 = vadd.f32 0.0, %v347
  %v349 = vpop.f32.mrf.mxu0
  %350 = vdwg.mxu0
  %351 = vmatpush.bf16.msra.mxu0 0
  %352 = vmatpush.bf16.msra.mxu0 0
  %353 = vmatpush.bf16.msra.mxu0 0
  %354 = vmatpush.bf16.msra.mxu0 0
  %355 = vmatpush.bf16.msra.mxu0 0
  %356 = vmatpush.bf16.msra.mxu0 0
  %357 = vmatpush.bf16.msra.mxu0 0
  %358 = vmatpush.bf16.msra.mxu0 %v324
  %359 = vmatmul.bf16.gmra.mxu0 %v318
  %v360 = vpop.f32.mrf.mxu0
  %v361 = vadd.f32 0.0, %v360
  %v362 = vpop.f32.mrf.mxu0
  %363 = vdwg.mxu0
  %364 = vmatpush.bf16.msra.mxu0 0
  %365 = vmatpush.bf16.msra.mxu0 0
  %366 = vmatpush.bf16.msra.mxu0 0
  %367 = vmatpush.bf16.msra.mxu0 0
  %368 = vmatpush.bf16.msra.mxu0 0
  %369 = vmatpush.bf16.msra.mxu0 0
  %370 = vmatpush.bf16.msra.mxu0 0
  %371 = vmatpush.bf16.msra.mxu0 %v327
  %372 = vmatmul.bf16.gmra.mxu0 %v318
  %v373 = vpop.f32.mrf.mxu0
  %v374 = vadd.f32 0.0, %v373
  %v375 = vpop.f32.mrf.mxu0
  %376 = vdwg.mxu0
  %377 = vmatpush.bf16.msra.mxu0 0
  %378 = vmatpush.bf16.msra.mxu0 0
  %379 = vmatpush.bf16.msra.mxu0 0
  %380 = vmatpush.bf16.msra.mxu0 0
  %381 = vmatpush.bf16.msra.mxu0 0
  %382 = vmatpush.bf16.msra.mxu0 0
  %383 = vmatpush.bf16.msra.mxu0 0
  %384 = vmatpush.bf16.msra.mxu0 %v330
  %385 = vmatmul.bf16.gmra.mxu0 %v318
  %v386 = vpop.f32.mrf.mxu0
  %v387 = vadd.f32 0.0, %v386
  %v388 = vpop.f32.mrf.mxu0
  %389 = vdwg.mxu0
  %390 = vmatpush.bf16.msra.mxu0 0
  %391 = vmatpush.bf16.msra.mxu0 0
  %392 = vmatpush.bf16.msra.mxu0 0
  %393 = vmatpush.bf16.msra.mxu0 0
  %394 = vmatpush.bf16.msra.mxu0 0
  %395 = vmatpush.bf16.msra.mxu0 0
  %396 = vmatpush.bf16.msra.mxu0 0
  %397 = vmatpush.bf16.msra.mxu0 %v333
  %398 = vmatmul.bf16.gmra.mxu0 %v318
  %v399 = vpop.f32.mrf.mxu0
  %v400 = vadd.f32 0.0, %v399
  %v401 = vpop.f32.mrf.mxu0
  %402 = vdwg.mxu0
  %403 = vmatpush.bf16.msra.mxu0 0
  %404 = vmatpush.bf16.msra.mxu0 0
  %405 = vmatpush.bf16.msra.mxu0 0
  %406 = vmatpush.bf16.msra.mxu0 0
  %407 = vmatpush.bf16.msra.mxu0 0
  %408 = vmatpush.bf16.msra.mxu0 0
  %409 = vmatpush.bf16.msra.mxu0 0
  %410 = vmatpush.bf16.msra.mxu0 %v336
  %411 = vmatmul.bf16.gmra.mxu0 %v318
  %v412 = vpop.f32.mrf.mxu0
  %v413 = vadd.f32 0.0, %v412
  %v414 = vpop.f32.mrf.mxu0
  %415 = vdwg.mxu0
  %v416 = vadd.f32 %v226, %v348
  %v417 = vadd.f32 %v239, %v361
  %v418 = vadd.f32 %v252, %v374
  %v419 = vadd.f32 %v265, %v387
  %v420 = vadd.f32 %v278, %v400
  %v421 = vadd.f32 %v291, %v413
  %s422 = scalar_lea.vmem %s2, 12
  %v423 = vld [vmem:[%s422] sm:$0xf]
  %424 = vrot.lane.b32.xlu0 %v51, 110
  %v425 = vpop.permute.xlu0 %424
  %426 = vrot.lane.b32.xlu0 %v52, 110
  %v427 = vpop.permute.xlu0 %426
  %428 = vrot.lane.b32.xlu0 %v53, 110
  %v429 = vpop.permute.xlu0 %428
  %430 = vrot.lane.b32.xlu0 %v54, 110
  %v431 = vpop.permute.xlu0 %430
  %432 = vrot.lane.b32.xlu0 %v55, 110
  %v433 = vpop.permute.xlu0 %432
  %434 = vrot.lane.b32.xlu0 %v56, 110
  %v435 = vpop.permute.xlu0 %434
  %436 = vrot.lane.b32.xlu0 %v57, 110
  %v437 = vpop.permute.xlu0 %436
  %vm438 = vcmask 900096
  %v439 = vsel %vm438, %v425, %v427
  %v440 = vsel %vm438, %v427, %v429
  %v441 = vsel %vm438, %v429, %v431
  %v442 = vsel %vm438, %v431, %v433
  %v443 = vsel %vm438, %v433, %v435
  %v444 = vsel %vm438, %v435, %v437
  %v446 = vsel %vm79, %v423, 0
  %v449 = vsel %vm83, %v439, 0
  %v452 = vsel %vm83, %v440, 0
  %v455 = vsel %vm83, %v441, 0
  %v458 = vsel %vm83, %v442, 0
  %v461 = vsel %vm83, %v443, 0
  %v464 = vsel %vm83, %v444, 0
  %466 = vmatpush.bf16.msra.mxu0 0
  %467 = vmatpush.bf16.msra.mxu0 0
  %468 = vmatpush.bf16.msra.mxu0 0
  %469 = vmatpush.bf16.msra.mxu0 0
  %470 = vmatpush.bf16.msra.mxu0 0
  %471 = vmatpush.bf16.msra.mxu0 0
  %472 = vmatpush.bf16.msra.mxu0 0
  %473 = vmatpush.bf16.msra.mxu0 %v449
  %474 = vmatmul.bf16.gmra.mxu0 %v446
  %v475 = vpop.f32.mrf.mxu0
  %v476 = vadd.f32 0.0, %v475
  %v477 = vpop.f32.mrf.mxu0
  %478 = vdwg.mxu0
  %479 = vmatpush.bf16.msra.mxu0 0
  %480 = vmatpush.bf16.msra.mxu0 0
  %481 = vmatpush.bf16.msra.mxu0 0
  %482 = vmatpush.bf16.msra.mxu0 0
  %483 = vmatpush.bf16.msra.mxu0 0
  %484 = vmatpush.bf16.msra.mxu0 0
  %485 = vmatpush.bf16.msra.mxu0 0
  %486 = vmatpush.bf16.msra.mxu0 %v452
  %487 = vmatmul.bf16.gmra.mxu0 %v446
  %v488 = vpop.f32.mrf.mxu0
  %v489 = vadd.f32 0.0, %v488
  %v490 = vpop.f32.mrf.mxu0
  %491 = vdwg.mxu0
  %492 = vmatpush.bf16.msra.mxu0 0
  %493 = vmatpush.bf16.msra.mxu0 0
  %494 = vmatpush.bf16.msra.mxu0 0
  %495 = vmatpush.bf16.msra.mxu0 0
  %496 = vmatpush.bf16.msra.mxu0 0
  %497 = vmatpush.bf16.msra.mxu0 0
  %498 = vmatpush.bf16.msra.mxu0 0
  %499 = vmatpush.bf16.msra.mxu0 %v455
  %500 = vmatmul.bf16.gmra.mxu0 %v446
  %v501 = vpop.f32.mrf.mxu0
  %v502 = vadd.f32 0.0, %v501
  %v503 = vpop.f32.mrf.mxu0
  %504 = vdwg.mxu0
  %505 = vmatpush.bf16.msra.mxu0 0
  %506 = vmatpush.bf16.msra.mxu0 0
  %507 = vmatpush.bf16.msra.mxu0 0
  %508 = vmatpush.bf16.msra.mxu0 0
  %509 = vmatpush.bf16.msra.mxu0 0
  %510 = vmatpush.bf16.msra.mxu0 0
  %511 = vmatpush.bf16.msra.mxu0 0
  %512 = vmatpush.bf16.msra.mxu0 %v458
  %513 = vmatmul.bf16.gmra.mxu0 %v446
  %v514 = vpop.f32.mrf.mxu0
  %v515 = vadd.f32 0.0, %v514
  %v516 = vpop.f32.mrf.mxu0
  %517 = vdwg.mxu0
  %518 = vmatpush.bf16.msra.mxu0 0
  %519 = vmatpush.bf16.msra.mxu0 0
  %520 = vmatpush.bf16.msra.mxu0 0
  %521 = vmatpush.bf16.msra.mxu0 0
  %522 = vmatpush.bf16.msra.mxu0 0
  %523 = vmatpush.bf16.msra.mxu0 0
  %524 = vmatpush.bf16.msra.mxu0 0
  %525 = vmatpush.bf16.msra.mxu0 %v461
  %526 = vmatmul.bf16.gmra.mxu0 %v446
  %v527 = vpop.f32.mrf.mxu0
  %v528 = vadd.f32 0.0, %v527
  %v529 = vpop.f32.mrf.mxu0
  %530 = vdwg.mxu0
  %531 = vmatpush.bf16.msra.mxu0 0
  %532 = vmatpush.bf16.msra.mxu0 0
  %533 = vmatpush.bf16.msra.mxu0 0
  %534 = vmatpush.bf16.msra.mxu0 0
  %535 = vmatpush.bf16.msra.mxu0 0
  %536 = vmatpush.bf16.msra.mxu0 0
  %537 = vmatpush.bf16.msra.mxu0 0
  %538 = vmatpush.bf16.msra.mxu0 %v464
  %539 = vmatmul.bf16.gmra.mxu0 %v446
  %v540 = vpop.f32.mrf.mxu0
  %v541 = vadd.f32 0.0, %v540
  %v542 = vpop.f32.mrf.mxu0
  %543 = vdwg.mxu0
  %v544 = vadd.f32 %v416, %v476
  %v545 = vadd.f32 %v417, %v489
  %v546 = vadd.f32 %v418, %v502
  %v547 = vadd.f32 %v419, %v515
  %v548 = vadd.f32 %v420, %v528
  %v549 = vadd.f32 %v421, %v541
  %s550 = scalar_lea.vmem %s2, 16
  %v551 = vld [vmem:[%s550] sm:$0xf]
  %552 = vrot.lane.b32.xlu0 %v51, 109
  %v553 = vpop.permute.xlu0 %552
  %554 = vrot.lane.b32.xlu0 %v52, 109
  %v555 = vpop.permute.xlu0 %554
  %556 = vrot.lane.b32.xlu0 %v53, 109
  %v557 = vpop.permute.xlu0 %556
  %558 = vrot.lane.b32.xlu0 %v54, 109
  %v559 = vpop.permute.xlu0 %558
  %560 = vrot.lane.b32.xlu0 %v55, 109
  %v561 = vpop.permute.xlu0 %560
  %562 = vrot.lane.b32.xlu0 %v56, 109
  %v563 = vpop.permute.xlu0 %562
  %564 = vrot.lane.b32.xlu0 %v57, 109
  %v565 = vpop.permute.xlu0 %564
  %vm566 = vcmask 891904
  %v567 = vsel %vm566, %v553, %v555
  %v568 = vsel %vm566, %v555, %v557
  %v569 = vsel %vm566, %v557, %v559
  %v570 = vsel %vm566, %v559, %v561
  %v571 = vsel %vm566, %v561, %v563
  %v572 = vsel %vm566, %v563, %v565
  %v574 = vsel %vm79, %v551, 0
  %v577 = vsel %vm83, %v567, 0
  %v580 = vsel %vm83, %v568, 0
  %v583 = vsel %vm83, %v569, 0
  %v586 = vsel %vm83, %v570, 0
  %v589 = vsel %vm83, %v571, 0
  %v592 = vsel %vm83, %v572, 0
  %594 = vmatpush.bf16.msra.mxu0 0
  %595 = vmatpush.bf16.msra.mxu0 0
  %596 = vmatpush.bf16.msra.mxu0 0
  %597 = vmatpush.bf16.msra.mxu0 0
  %598 = vmatpush.bf16.msra.mxu0 0
  %599 = vmatpush.bf16.msra.mxu0 0
  %600 = vmatpush.bf16.msra.mxu0 0
  %601 = vmatpush.bf16.msra.mxu0 %v577
  %602 = vmatmul.bf16.gmra.mxu0 %v574
  %v603 = vpop.f32.mrf.mxu0
  %v604 = vadd.f32 0.0, %v603
  %v605 = vpop.f32.mrf.mxu0
  %606 = vdwg.mxu0
  %607 = vmatpush.bf16.msra.mxu0 0
  %608 = vmatpush.bf16.msra.mxu0 0
  %609 = vmatpush.bf16.msra.mxu0 0
  %610 = vmatpush.bf16.msra.mxu0 0
  %611 = vmatpush.bf16.msra.mxu0 0
  %612 = vmatpush.bf16.msra.mxu0 0
  %613 = vmatpush.bf16.msra.mxu0 0
  %614 = vmatpush.bf16.msra.mxu0 %v580
  %615 = vmatmul.bf16.gmra.mxu0 %v574
  %v616 = vpop.f32.mrf.mxu0
  %v617 = vadd.f32 0.0, %v616
  %v618 = vpop.f32.mrf.mxu0
  %619 = vdwg.mxu0
  %620 = vmatpush.bf16.msra.mxu0 0
  %621 = vmatpush.bf16.msra.mxu0 0
  %622 = vmatpush.bf16.msra.mxu0 0
  %623 = vmatpush.bf16.msra.mxu0 0
  %624 = vmatpush.bf16.msra.mxu0 0
  %625 = vmatpush.bf16.msra.mxu0 0
  %626 = vmatpush.bf16.msra.mxu0 0
  %627 = vmatpush.bf16.msra.mxu0 %v583
  %628 = vmatmul.bf16.gmra.mxu0 %v574
  %v629 = vpop.f32.mrf.mxu0
  %v630 = vadd.f32 0.0, %v629
  %v631 = vpop.f32.mrf.mxu0
  %632 = vdwg.mxu0
  %633 = vmatpush.bf16.msra.mxu0 0
  %634 = vmatpush.bf16.msra.mxu0 0
  %635 = vmatpush.bf16.msra.mxu0 0
  %636 = vmatpush.bf16.msra.mxu0 0
  %637 = vmatpush.bf16.msra.mxu0 0
  %638 = vmatpush.bf16.msra.mxu0 0
  %639 = vmatpush.bf16.msra.mxu0 0
  %640 = vmatpush.bf16.msra.mxu0 %v586
  %641 = vmatmul.bf16.gmra.mxu0 %v574
  %v642 = vpop.f32.mrf.mxu0
  %v643 = vadd.f32 0.0, %v642
  %v644 = vpop.f32.mrf.mxu0
  %645 = vdwg.mxu0
  %646 = vmatpush.bf16.msra.mxu0 0
  %647 = vmatpush.bf16.msra.mxu0 0
  %648 = vmatpush.bf16.msra.mxu0 0
  %649 = vmatpush.bf16.msra.mxu0 0
  %650 = vmatpush.bf16.msra.mxu0 0
  %651 = vmatpush.bf16.msra.mxu0 0
  %652 = vmatpush.bf16.msra.mxu0 0
  %653 = vmatpush.bf16.msra.mxu0 %v589
  %654 = vmatmul.bf16.gmra.mxu0 %v574
  %v655 = vpop.f32.mrf.mxu0
  %v656 = vadd.f32 0.0, %v655
  %v657 = vpop.f32.mrf.mxu0
  %658 = vdwg.mxu0
  %659 = vmatpush.bf16.msra.mxu0 0
  %660 = vmatpush.bf16.msra.mxu0 0
  %661 = vmatpush.bf16.msra.mxu0 0
  %662 = vmatpush.bf16.msra.mxu0 0
  %663 = vmatpush.bf16.msra.mxu0 0
  %664 = vmatpush.bf16.msra.mxu0 0
  %665 = vmatpush.bf16.msra.mxu0 0
  %666 = vmatpush.bf16.msra.mxu0 %v592
  %667 = vmatmul.bf16.gmra.mxu0 %v574
  %v668 = vpop.f32.mrf.mxu0
  %v669 = vadd.f32 0.0, %v668
  %v670 = vpop.f32.mrf.mxu0
  %671 = vdwg.mxu0
  %v672 = vadd.f32 %v544, %v604
  %v673 = vadd.f32 %v545, %v617
  %v674 = vadd.f32 %v546, %v630
  %v675 = vadd.f32 %v547, %v643
  %v676 = vadd.f32 %v548, %v656
  %v677 = vadd.f32 %v549, %v669
  %s678 = scalar_lea.vmem %s2, 20
  %v679 = vld [vmem:[%s678] sm:$0xf]
  %680 = vrot.lane.b32.xlu0 %v51, 108
  %v681 = vpop.permute.xlu0 %680
  %682 = vrot.lane.b32.xlu0 %v52, 108
  %v683 = vpop.permute.xlu0 %682
  %684 = vrot.lane.b32.xlu0 %v53, 108
  %v685 = vpop.permute.xlu0 %684
  %686 = vrot.lane.b32.xlu0 %v54, 108
  %v687 = vpop.permute.xlu0 %686
  %688 = vrot.lane.b32.xlu0 %v55, 108
  %v689 = vpop.permute.xlu0 %688
  %690 = vrot.lane.b32.xlu0 %v56, 108
  %v691 = vpop.permute.xlu0 %690
  %692 = vrot.lane.b32.xlu0 %v57, 108
  %v693 = vpop.permute.xlu0 %692
  %vm694 = vcmask 883712
  %v695 = vsel %vm694, %v681, %v683
  %v696 = vsel %vm694, %v683, %v685
  %v697 = vsel %vm694, %v685, %v687
  %v698 = vsel %vm694, %v687, %v689
  %v699 = vsel %vm694, %v689, %v691
  %v700 = vsel %vm694, %v691, %v693
  %v702 = vsel %vm79, %v679, 0
  %v705 = vsel %vm83, %v695, 0
  %v708 = vsel %vm83, %v696, 0
  %v711 = vsel %vm83, %v697, 0
  %v714 = vsel %vm83, %v698, 0
  %v717 = vsel %vm83, %v699, 0
  %v720 = vsel %vm83, %v700, 0
  %722 = vmatpush.bf16.msra.mxu0 0
  %723 = vmatpush.bf16.msra.mxu0 0
  %724 = vmatpush.bf16.msra.mxu0 0
  %725 = vmatpush.bf16.msra.mxu0 0
  %726 = vmatpush.bf16.msra.mxu0 0
  %727 = vmatpush.bf16.msra.mxu0 0
  %728 = vmatpush.bf16.msra.mxu0 0
  %729 = vmatpush.bf16.msra.mxu0 %v705
  %730 = vmatmul.bf16.gmra.mxu0 %v702
  %v731 = vpop.f32.mrf.mxu0
  %v732 = vadd.f32 0.0, %v731
  %v733 = vpop.f32.mrf.mxu0
  %734 = vdwg.mxu0
  %735 = vmatpush.bf16.msra.mxu0 0
  %736 = vmatpush.bf16.msra.mxu0 0
  %737 = vmatpush.bf16.msra.mxu0 0
  %738 = vmatpush.bf16.msra.mxu0 0
  %739 = vmatpush.bf16.msra.mxu0 0
  %740 = vmatpush.bf16.msra.mxu0 0
  %741 = vmatpush.bf16.msra.mxu0 0
  %742 = vmatpush.bf16.msra.mxu0 %v708
  %743 = vmatmul.bf16.gmra.mxu0 %v702
  %v744 = vpop.f32.mrf.mxu0
  %v745 = vadd.f32 0.0, %v744
  %v746 = vpop.f32.mrf.mxu0
  %747 = vdwg.mxu0
  %748 = vmatpush.bf16.msra.mxu0 0
  %749 = vmatpush.bf16.msra.mxu0 0
  %750 = vmatpush.bf16.msra.mxu0 0
  %751 = vmatpush.bf16.msra.mxu0 0
  %752 = vmatpush.bf16.msra.mxu0 0
  %753 = vmatpush.bf16.msra.mxu0 0
  %754 = vmatpush.bf16.msra.mxu0 0
  %755 = vmatpush.bf16.msra.mxu0 %v711
  %756 = vmatmul.bf16.gmra.mxu0 %v702
  %v757 = vpop.f32.mrf.mxu0
  %v758 = vadd.f32 0.0, %v757
  %v759 = vpop.f32.mrf.mxu0
  %760 = vdwg.mxu0
  %761 = vmatpush.bf16.msra.mxu0 0
  %762 = vmatpush.bf16.msra.mxu0 0
  %763 = vmatpush.bf16.msra.mxu0 0
  %764 = vmatpush.bf16.msra.mxu0 0
  %765 = vmatpush.bf16.msra.mxu0 0
  %766 = vmatpush.bf16.msra.mxu0 0
  %767 = vmatpush.bf16.msra.mxu0 0
  %768 = vmatpush.bf16.msra.mxu0 %v714
  %769 = vmatmul.bf16.gmra.mxu0 %v702
  %v770 = vpop.f32.mrf.mxu0
  %v771 = vadd.f32 0.0, %v770
  %v772 = vpop.f32.mrf.mxu0
  %773 = vdwg.mxu0
  %774 = vmatpush.bf16.msra.mxu0 0
  %775 = vmatpush.bf16.msra.mxu0 0
  %776 = vmatpush.bf16.msra.mxu0 0
  %777 = vmatpush.bf16.msra.mxu0 0
  %778 = vmatpush.bf16.msra.mxu0 0
  %779 = vmatpush.bf16.msra.mxu0 0
  %780 = vmatpush.bf16.msra.mxu0 0
  %781 = vmatpush.bf16.msra.mxu0 %v717
  %782 = vmatmul.bf16.gmra.mxu0 %v702
  %v783 = vpop.f32.mrf.mxu0
  %v784 = vadd.f32 0.0, %v783
  %v785 = vpop.f32.mrf.mxu0
  %786 = vdwg.mxu0
  %787 = vmatpush.bf16.msra.mxu0 0
  %788 = vmatpush.bf16.msra.mxu0 0
  %789 = vmatpush.bf16.msra.mxu0 0
  %790 = vmatpush.bf16.msra.mxu0 0
  %791 = vmatpush.bf16.msra.mxu0 0
  %792 = vmatpush.bf16.msra.mxu0 0
  %793 = vmatpush.bf16.msra.mxu0 0
  %794 = vmatpush.bf16.msra.mxu0 %v720
  %795 = vmatmul.bf16.gmra.mxu0 %v702
  %v796 = vpop.f32.mrf.mxu0
  %v797 = vadd.f32 0.0, %v796
  %v798 = vpop.f32.mrf.mxu0
  %799 = vdwg.mxu0
  %v800 = vadd.f32 %v672, %v732
  %v801 = vadd.f32 %v673, %v745
  %v802 = vadd.f32 %v674, %v758
  %v803 = vadd.f32 %v675, %v771
  %v804 = vadd.f32 %v676, %v784
  %v805 = vadd.f32 %v677, %v797
  %s806 = scalar_lea.vmem %s2, 24
  %v807 = vld [vmem:[%s806] sm:$0xf]
  %808 = vrot.lane.b32.xlu0 %v51, 92
  %v809 = vpop.permute.xlu0 %808
  %810 = vrot.lane.b32.xlu0 %v52, 92
  %v811 = vpop.permute.xlu0 %810
  %812 = vrot.lane.b32.xlu0 %v53, 92
  %v813 = vpop.permute.xlu0 %812
  %814 = vrot.lane.b32.xlu0 %v54, 92
  %v815 = vpop.permute.xlu0 %814
  %816 = vrot.lane.b32.xlu0 %v55, 92
  %v817 = vpop.permute.xlu0 %816
  %818 = vrot.lane.b32.xlu0 %v56, 92
  %v819 = vpop.permute.xlu0 %818
  %820 = vrot.lane.b32.xlu0 %v57, 92
  %v821 = vpop.permute.xlu0 %820
  %vm822 = vcmask 752640
  %v823 = vsel %vm822, %v809, %v811
  %v824 = vsel %vm822, %v811, %v813
  %v825 = vsel %vm822, %v813, %v815
  %v826 = vsel %vm822, %v815, %v817
  %v827 = vsel %vm822, %v817, %v819
  %v828 = vsel %vm822, %v819, %v821
  %v830 = vsel %vm79, %v807, 0
  %v833 = vsel %vm83, %v823, 0
  %v836 = vsel %vm83, %v824, 0
  %v839 = vsel %vm83, %v825, 0
  %v842 = vsel %vm83, %v826, 0
  %v845 = vsel %vm83, %v827, 0
  %v848 = vsel %vm83, %v828, 0
  %850 = vmatpush.bf16.msra.mxu0 0
  %851 = vmatpush.bf16.msra.mxu0 0
  %852 = vmatpush.bf16.msra.mxu0 0
  %853 = vmatpush.bf16.msra.mxu0 0
  %854 = vmatpush.bf16.msra.mxu0 0
  %855 = vmatpush.bf16.msra.mxu0 0
  %856 = vmatpush.bf16.msra.mxu0 0
  %857 = vmatpush.bf16.msra.mxu0 %v833
  %858 = vmatmul.bf16.gmra.mxu0 %v830
  %v859 = vpop.f32.mrf.mxu0
  %v860 = vadd.f32 0.0, %v859
  %v861 = vpop.f32.mrf.mxu0
  %862 = vdwg.mxu0
  %863 = vmatpush.bf16.msra.mxu0 0
  %864 = vmatpush.bf16.msra.mxu0 0
  %865 = vmatpush.bf16.msra.mxu0 0
  %866 = vmatpush.bf16.msra.mxu0 0
  %867 = vmatpush.bf16.msra.mxu0 0
  %868 = vmatpush.bf16.msra.mxu0 0
  %869 = vmatpush.bf16.msra.mxu0 0
  %870 = vmatpush.bf16.msra.mxu0 %v836
  %871 = vmatmul.bf16.gmra.mxu0 %v830
  %v872 = vpop.f32.mrf.mxu0
  %v873 = vadd.f32 0.0, %v872
  %v874 = vpop.f32.mrf.mxu0
  %875 = vdwg.mxu0
  %876 = vmatpush.bf16.msra.mxu0 0
  %877 = vmatpush.bf16.msra.mxu0 0
  %878 = vmatpush.bf16.msra.mxu0 0
  %879 = vmatpush.bf16.msra.mxu0 0
  %880 = vmatpush.bf16.msra.mxu0 0
  %881 = vmatpush.bf16.msra.mxu0 0
  %882 = vmatpush.bf16.msra.mxu0 0
  %883 = vmatpush.bf16.msra.mxu0 %v839
  %884 = vmatmul.bf16.gmra.mxu0 %v830
  %v885 = vpop.f32.mrf.mxu0
  %v886 = vadd.f32 0.0, %v885
  %v887 = vpop.f32.mrf.mxu0
  %888 = vdwg.mxu0
  %889 = vmatpush.bf16.msra.mxu0 0
  %890 = vmatpush.bf16.msra.mxu0 0
  %891 = vmatpush.bf16.msra.mxu0 0
  %892 = vmatpush.bf16.msra.mxu0 0
  %893 = vmatpush.bf16.msra.mxu0 0
  %894 = vmatpush.bf16.msra.mxu0 0
  %895 = vmatpush.bf16.msra.mxu0 0
  %896 = vmatpush.bf16.msra.mxu0 %v842
  %897 = vmatmul.bf16.gmra.mxu0 %v830
  %v898 = vpop.f32.mrf.mxu0
  %v899 = vadd.f32 0.0, %v898
  %v900 = vpop.f32.mrf.mxu0
  %901 = vdwg.mxu0
  %902 = vmatpush.bf16.msra.mxu0 0
  %903 = vmatpush.bf16.msra.mxu0 0
  %904 = vmatpush.bf16.msra.mxu0 0
  %905 = vmatpush.bf16.msra.mxu0 0
  %906 = vmatpush.bf16.msra.mxu0 0
  %907 = vmatpush.bf16.msra.mxu0 0
  %908 = vmatpush.bf16.msra.mxu0 0
  %909 = vmatpush.bf16.msra.mxu0 %v845
  %910 = vmatmul.bf16.gmra.mxu0 %v830
  %v911 = vpop.f32.mrf.mxu0
  %v912 = vadd.f32 0.0, %v911
  %v913 = vpop.f32.mrf.mxu0
  %914 = vdwg.mxu0
  %915 = vmatpush.bf16.msra.mxu0 0
  %916 = vmatpush.bf16.msra.mxu0 0
  %917 = vmatpush.bf16.msra.mxu0 0
  %918 = vmatpush.bf16.msra.mxu0 0
  %919 = vmatpush.bf16.msra.mxu0 0
  %920 = vmatpush.bf16.msra.mxu0 0
  %921 = vmatpush.bf16.msra.mxu0 0
  %922 = vmatpush.bf16.msra.mxu0 %v848
  %923 = vmatmul.bf16.gmra.mxu0 %v830
  %v924 = vpop.f32.mrf.mxu0
  %v925 = vadd.f32 0.0, %v924
  %v926 = vpop.f32.mrf.mxu0
  %927 = vdwg.mxu0
  %v928 = vadd.f32 %v800, %v860
  %v929 = vadd.f32 %v801, %v873
  %v930 = vadd.f32 %v802, %v886
  %v931 = vadd.f32 %v803, %v899
  %v932 = vadd.f32 %v804, %v912
  %v933 = vadd.f32 %v805, %v925
  %s934 = scalar_lea.vmem %s2, 28
  %v935 = vld [vmem:[%s934] sm:$0xf]
  %936 = vrot.lane.b32.xlu0 %v51, 91
  %v937 = vpop.permute.xlu0 %936
  %938 = vrot.lane.b32.xlu0 %v52, 91
  %v939 = vpop.permute.xlu0 %938
  %940 = vrot.lane.b32.xlu0 %v53, 91
  %v941 = vpop.permute.xlu0 %940
  %942 = vrot.lane.b32.xlu0 %v54, 91
  %v943 = vpop.permute.xlu0 %942
  %944 = vrot.lane.b32.xlu0 %v55, 91
  %v945 = vpop.permute.xlu0 %944
  %946 = vrot.lane.b32.xlu0 %v56, 91
  %v947 = vpop.permute.xlu0 %946
  %948 = vrot.lane.b32.xlu0 %v57, 91
  %v949 = vpop.permute.xlu0 %948
  %vm950 = vcmask 744448
  %v951 = vsel %vm950, %v937, %v939
  %v952 = vsel %vm950, %v939, %v941
  %v953 = vsel %vm950, %v941, %v943
  %v954 = vsel %vm950, %v943, %v945
  %v955 = vsel %vm950, %v945, %v947
  %v956 = vsel %vm950, %v947, %v949
  %v958 = vsel %vm79, %v935, 0
  %v961 = vsel %vm83, %v951, 0
  %v964 = vsel %vm83, %v952, 0
  %v967 = vsel %vm83, %v953, 0
  %v970 = vsel %vm83, %v954, 0
  %v973 = vsel %vm83, %v955, 0
  %v976 = vsel %vm83, %v956, 0
  %978 = vmatpush.bf16.msra.mxu0 0
  %979 = vmatpush.bf16.msra.mxu0 0
  %980 = vmatpush.bf16.msra.mxu0 0
  %981 = vmatpush.bf16.msra.mxu0 0
  %982 = vmatpush.bf16.msra.mxu0 0
  %983 = vmatpush.bf16.msra.mxu0 0
  %984 = vmatpush.bf16.msra.mxu0 0
  %985 = vmatpush.bf16.msra.mxu0 %v961
  %986 = vmatmul.bf16.gmra.mxu0 %v958
  %v987 = vpop.f32.mrf.mxu0
  %v988 = vadd.f32 0.0, %v987
  %v989 = vpop.f32.mrf.mxu0
  %990 = vdwg.mxu0
  %991 = vmatpush.bf16.msra.mxu0 0
  %992 = vmatpush.bf16.msra.mxu0 0
  %993 = vmatpush.bf16.msra.mxu0 0
  %994 = vmatpush.bf16.msra.mxu0 0
  %995 = vmatpush.bf16.msra.mxu0 0
  %996 = vmatpush.bf16.msra.mxu0 0
  %997 = vmatpush.bf16.msra.mxu0 0
  %998 = vmatpush.bf16.msra.mxu0 %v964
  %999 = vmatmul.bf16.gmra.mxu0 %v958
  %v1000 = vpop.f32.mrf.mxu0
  %v1001 = vadd.f32 0.0, %v1000
  %v1002 = vpop.f32.mrf.mxu0
  %1003 = vdwg.mxu0
  %1004 = vmatpush.bf16.msra.mxu0 0
  %1005 = vmatpush.bf16.msra.mxu0 0
  %1006 = vmatpush.bf16.msra.mxu0 0
  %1007 = vmatpush.bf16.msra.mxu0 0
  %1008 = vmatpush.bf16.msra.mxu0 0
  %1009 = vmatpush.bf16.msra.mxu0 0
  %1010 = vmatpush.bf16.msra.mxu0 0
  %1011 = vmatpush.bf16.msra.mxu0 %v967
  %1012 = vmatmul.bf16.gmra.mxu0 %v958
  %v1013 = vpop.f32.mrf.mxu0
  %v1014 = vadd.f32 0.0, %v1013
  %v1015 = vpop.f32.mrf.mxu0
  %1016 = vdwg.mxu0
  %1017 = vmatpush.bf16.msra.mxu0 0
  %1018 = vmatpush.bf16.msra.mxu0 0
  %1019 = vmatpush.bf16.msra.mxu0 0
  %1020 = vmatpush.bf16.msra.mxu0 0
  %1021 = vmatpush.bf16.msra.mxu0 0
  %1022 = vmatpush.bf16.msra.mxu0 0
  %1023 = vmatpush.bf16.msra.mxu0 0
  %1024 = vmatpush.bf16.msra.mxu0 %v970
  %1025 = vmatmul.bf16.gmra.mxu0 %v958
  %v1026 = vpop.f32.mrf.mxu0
  %v1027 = vadd.f32 0.0, %v1026
  %v1028 = vpop.f32.mrf.mxu0
  %1029 = vdwg.mxu0
  %1030 = vmatpush.bf16.msra.mxu0 0
  %1031 = vmatpush.bf16.msra.mxu0 0
  %1032 = vmatpush.bf16.msra.mxu0 0
  %1033 = vmatpush.bf16.msra.mxu0 0
  %1034 = vmatpush.bf16.msra.mxu0 0
  %1035 = vmatpush.bf16.msra.mxu0 0
  %1036 = vmatpush.bf16.msra.mxu0 0
  %1037 = vmatpush.bf16.msra.mxu0 %v973
  %1038 = vmatmul.bf16.gmra.mxu0 %v958
  %v1039 = vpop.f32.mrf.mxu0
  %v1040 = vadd.f32 0.0, %v1039
  %v1041 = vpop.f32.mrf.mxu0
  %1042 = vdwg.mxu0
  %1043 = vmatpush.bf16.msra.mxu0 0
  %1044 = vmatpush.bf16.msra.mxu0 0
  %1045 = vmatpush.bf16.msra.mxu0 0
  %1046 = vmatpush.bf16.msra.mxu0 0
  %1047 = vmatpush.bf16.msra.mxu0 0
  %1048 = vmatpush.bf16.msra.mxu0 0
  %1049 = vmatpush.bf16.msra.mxu0 0
  %1050 = vmatpush.bf16.msra.mxu0 %v976
  %1051 = vmatmul.bf16.gmra.mxu0 %v958
  %v1052 = vpop.f32.mrf.mxu0
  %v1053 = vadd.f32 0.0, %v1052
  %v1054 = vpop.f32.mrf.mxu0
  %1055 = vdwg.mxu0
  %v1056 = vadd.f32 %v928, %v988
  %v1057 = vadd.f32 %v929, %v1001
  %v1058 = vadd.f32 %v930, %v1014
  %v1059 = vadd.f32 %v931, %v1027
  %v1060 = vadd.f32 %v932, %v1040
  %v1061 = vadd.f32 %v933, %v1053
  %s1062 = scalar_lea.vmem %s2, 32
  %v1063 = vld [vmem:[%s1062] sm:$0xf]
  %1064 = vrot.lane.b32.xlu0 %v51, 90
  %v1065 = vpop.permute.xlu0 %1064
  %1066 = vrot.lane.b32.xlu0 %v52, 90
  %v1067 = vpop.permute.xlu0 %1066
  %1068 = vrot.lane.b32.xlu0 %v53, 90
  %v1069 = vpop.permute.xlu0 %1068
  %1070 = vrot.lane.b32.xlu0 %v54, 90
  %v1071 = vpop.permute.xlu0 %1070
  %1072 = vrot.lane.b32.xlu0 %v55, 90
  %v1073 = vpop.permute.xlu0 %1072
  %1074 = vrot.lane.b32.xlu0 %v56, 90
  %v1075 = vpop.permute.xlu0 %1074
  %1076 = vrot.lane.b32.xlu0 %v57, 90
  %v1077 = vpop.permute.xlu0 %1076
  %vm1078 = vcmask 736256
  %v1079 = vsel %vm1078, %v1065, %v1067
  %v1080 = vsel %vm1078, %v1067, %v1069
  %v1081 = vsel %vm1078, %v1069, %v1071
  %v1082 = vsel %vm1078, %v1071, %v1073
  %v1083 = vsel %vm1078, %v1073, %v1075
  %v1084 = vsel %vm1078, %v1075, %v1077
  %v1086 = vsel %vm79, %v1063, 0
  %v1089 = vsel %vm83, %v1079, 0
  %v1092 = vsel %vm83, %v1080, 0
  %v1095 = vsel %vm83, %v1081, 0
  %v1098 = vsel %vm83, %v1082, 0
  %v1101 = vsel %vm83, %v1083, 0
  %v1104 = vsel %vm83, %v1084, 0
  %1106 = vmatpush.bf16.msra.mxu0 0
  %1107 = vmatpush.bf16.msra.mxu0 0
  %1108 = vmatpush.bf16.msra.mxu0 0
  %1109 = vmatpush.bf16.msra.mxu0 0
  %1110 = vmatpush.bf16.msra.mxu0 0
  %1111 = vmatpush.bf16.msra.mxu0 0
  %1112 = vmatpush.bf16.msra.mxu0 0
  %1113 = vmatpush.bf16.msra.mxu0 %v1089
  %1114 = vmatmul.bf16.gmra.mxu0 %v1086
  %v1115 = vpop.f32.mrf.mxu0
  %v1116 = vadd.f32 0.0, %v1115
  %v1117 = vpop.f32.mrf.mxu0
  %1118 = vdwg.mxu0
  %1119 = vmatpush.bf16.msra.mxu0 0
  %1120 = vmatpush.bf16.msra.mxu0 0
  %1121 = vmatpush.bf16.msra.mxu0 0
  %1122 = vmatpush.bf16.msra.mxu0 0
  %1123 = vmatpush.bf16.msra.mxu0 0
  %1124 = vmatpush.bf16.msra.mxu0 0
  %1125 = vmatpush.bf16.msra.mxu0 0
  %1126 = vmatpush.bf16.msra.mxu0 %v1092
  %1127 = vmatmul.bf16.gmra.mxu0 %v1086
  %v1128 = vpop.f32.mrf.mxu0
  %v1129 = vadd.f32 0.0, %v1128
  %v1130 = vpop.f32.mrf.mxu0
  %1131 = vdwg.mxu0
  %1132 = vmatpush.bf16.msra.mxu0 0
  %1133 = vmatpush.bf16.msra.mxu0 0
  %1134 = vmatpush.bf16.msra.mxu0 0
  %1135 = vmatpush.bf16.msra.mxu0 0
  %1136 = vmatpush.bf16.msra.mxu0 0
  %1137 = vmatpush.bf16.msra.mxu0 0
  %1138 = vmatpush.bf16.msra.mxu0 0
  %1139 = vmatpush.bf16.msra.mxu0 %v1095
  %1140 = vmatmul.bf16.gmra.mxu0 %v1086
  %v1141 = vpop.f32.mrf.mxu0
  %v1142 = vadd.f32 0.0, %v1141
  %v1143 = vpop.f32.mrf.mxu0
  %1144 = vdwg.mxu0
  %1145 = vmatpush.bf16.msra.mxu0 0
  %1146 = vmatpush.bf16.msra.mxu0 0
  %1147 = vmatpush.bf16.msra.mxu0 0
  %1148 = vmatpush.bf16.msra.mxu0 0
  %1149 = vmatpush.bf16.msra.mxu0 0
  %1150 = vmatpush.bf16.msra.mxu0 0
  %1151 = vmatpush.bf16.msra.mxu0 0
  %1152 = vmatpush.bf16.msra.mxu0 %v1098
  %1153 = vmatmul.bf16.gmra.mxu0 %v1086
  %v1154 = vpop.f32.mrf.mxu0
  %v1155 = vadd.f32 0.0, %v1154
  %v1156 = vpop.f32.mrf.mxu0
  %1157 = vdwg.mxu0
  %1158 = vmatpush.bf16.msra.mxu0 0
  %1159 = vmatpush.bf16.msra.mxu0 0
  %1160 = vmatpush.bf16.msra.mxu0 0
  %1161 = vmatpush.bf16.msra.mxu0 0
  %1162 = vmatpush.bf16.msra.mxu0 0
  %1163 = vmatpush.bf16.msra.mxu0 0
  %1164 = vmatpush.bf16.msra.mxu0 0
  %1165 = vmatpush.bf16.msra.mxu0 %v1101
  %1166 = vmatmul.bf16.gmra.mxu0 %v1086
  %v1167 = vpop.f32.mrf.mxu0
  %v1168 = vadd.f32 0.0, %v1167
  %v1169 = vpop.f32.mrf.mxu0
  %1170 = vdwg.mxu0
  %1171 = vmatpush.bf16.msra.mxu0 0
  %1172 = vmatpush.bf16.msra.mxu0 0
  %1173 = vmatpush.bf16.msra.mxu0 0
  %1174 = vmatpush.bf16.msra.mxu0 0
  %1175 = vmatpush.bf16.msra.mxu0 0
  %1176 = vmatpush.bf16.msra.mxu0 0
  %1177 = vmatpush.bf16.msra.mxu0 0
  %1178 = vmatpush.bf16.msra.mxu0 %v1104
  %1179 = vmatmul.bf16.gmra.mxu0 %v1086
  %v1180 = vpop.f32.mrf.mxu0
  %v1181 = vadd.f32 0.0, %v1180
  %v1182 = vpop.f32.mrf.mxu0
  %1183 = vdwg.mxu0
  %v1184 = vadd.f32 %v1056, %v1116
  %v1185 = vadd.f32 %v1057, %v1129
  %v1186 = vadd.f32 %v1058, %v1142
  %v1187 = vadd.f32 %v1059, %v1155
  %v1188 = vadd.f32 %v1060, %v1168
  %v1189 = vadd.f32 %v1061, %v1181
  %v1190 = vld [vmem:[%s3] sm:$0xff]
  %1192 = vset.pattern.permute.xlu0 0
  %1193 = vperm.xlu0 %1192, %v1190
  %v1194 = vpop.permute.xlu0 %1193
  %v1196 = vmul.f32 %v1184, %v1194
  %v1197 = vmul.f32 %v1185, %v1194
  %v1198 = vmul.f32 %v1186, %v1194
  %v1199 = vmul.f32 %v1187, %v1194
  %v1200 = vmul.f32 %v1188, %v1194
  %v1201 = vmul.f32 %v1189, %v1194
  %v1202 = vld [vmem:[%s4] sm:$0xff]
  %1204 = vset.pattern.permute.xlu0 0
  %1205 = vperm.xlu0 %1204, %v1202
  %v1206 = vpop.permute.xlu0 %1205
  %v1208 = vadd.f32 %v1196, %v1206
  %v1209 = vadd.f32 %v1197, %v1206
  %v1210 = vadd.f32 %v1198, %v1206
  %v1211 = vadd.f32 %v1199, %v1206
  %v1212 = vadd.f32 %v1200, %v1206
  %v1213 = vadd.f32 %v1201, %v1206
  %v1214 = vmax.f32 %v1208, 0.0
  %v1215 = vmax.f32 %v1209, 0.0
  %v1216 = vmax.f32 %v1210, 0.0
  %v1217 = vmax.f32 %v1211, 0.0
  %v1218 = vmax.f32 %v1212, 0.0
  %v1219 = vmax.f32 %v1213, 0.0
  %v1220 = vld [vmem:[%s1] sm:$0x3f]
  %v1222 = vperm.slane %v1220, 0
  %v1223 = vperm.slane %v1220, 1
  %v1224 = vperm.slane %v1220, 2
  %v1225 = vperm.slane %v1220, 3
  %v1226 = vperm.slane %v1220, 4
  %v1227 = vperm.slane %v1220, 5
  %v1234 = vmul.f32 %v1214, %v1222
  %v1235 = vmul.f32 %v1215, %v1223
  %v1236 = vmul.f32 %v1216, %v1224
  %v1237 = vmul.f32 %v1217, %v1225
  %v1238 = vmul.f32 %v1218, %v1226
  %v1239 = vmul.f32 %v1219, %v1227
  %1240 = vst [vmem:[#allocation2] sm:$0xf] 0
  %1241 = vst [vmem:[#allocation2 + $0x1c] sm:$0xf] 0
  %v1242 = vpack.c.bf16 %v1235, %v1234
  %v1243 = vpack.c.bf16 %v1237, %v1236
  %v1244 = vpack.c.bf16 %v1239, %v1238
  %1245 = vst [vmem:[#allocation2 + $0x4] sm:$0xff] %v1242
  %1246 = vst [vmem:[#allocation2 + $0xc] sm:$0xff] %v1243
  %1247 = vst [vmem:[#allocation2 + $0x14] sm:$0xff] %v1244
  %v1248 = vld [vmem:[#allocation2] sm:$0xff]
  %v1249 = vld [vmem:[#allocation2 + $0x8] sm:$0xff]
  %v1250 = vld [vmem:[#allocation2 + $0x10] sm:$0xff]
  %v1251 = vld [vmem:[#allocation2 + $0x18] sm:$0xf]
  %v1252 = vld [vmem:[%s5] sm:$0xf]
  %s1253 = scalar_lea.vmem %s5, 4
  %v1254 = vld [vmem:[%s1253] sm:$0xf]
  %v1259 = vunpack.c.l.b16 %v1248
  %v1260 = vunpack.c.h.b16 %v1248
  %v1261 = vunpack.c.l.b16 %v1249
  %v1262 = vunpack.c.h.b16 %v1249
  %v1263 = vunpack.c.l.b16 %v1250
  %v1264 = vunpack.c.h.b16 %v1250
  %v1265 = vunpack.c.l.b16 %v1251
  %v1266 = vpack.c.b16 %v1259, %v1259
  %v1267 = vpack.c.b16 %v1260, %v1260
  %v1268 = vpack.c.b16 %v1261, %v1261
  %v1269 = vpack.c.b16 %v1262, %v1262
  %v1270 = vpack.c.b16 %v1263, %v1263
  %v1271 = vpack.c.b16 %v1264, %v1264
  %v1272 = vpack.c.b16 %v1265, %v1265
  %1273 = vrot.lane.b32.xlu0 %v1266, 18
  %v1274 = vpop.permute.xlu0 %1273
  %1275 = vrot.lane.b32.xlu0 %v1267, 18
  %v1276 = vpop.permute.xlu0 %1275
  %1277 = vrot.lane.b32.xlu0 %v1268, 18
  %v1278 = vpop.permute.xlu0 %1277
  %1279 = vrot.lane.b32.xlu0 %v1269, 18
  %v1280 = vpop.permute.xlu0 %1279
  %1281 = vrot.lane.b32.xlu0 %v1270, 18
  %v1282 = vpop.permute.xlu0 %1281
  %1283 = vrot.lane.b32.xlu0 %v1271, 18
  %v1284 = vpop.permute.xlu0 %1283
  %1285 = vrot.lane.b32.xlu0 %v1272, 18
  %v1286 = vpop.permute.xlu0 %1285
  %vm1287 = vcmask 146432
  %v1288 = vsel %vm1287, %v1274, %v1276
  %v1289 = vsel %vm1287, %v1276, %v1278
  %v1290 = vsel %vm1287, %v1278, %v1280
  %v1291 = vsel %vm1287, %v1280, %v1282
  %v1292 = vsel %vm1287, %v1282, %v1284
  %v1293 = vsel %vm1287, %v1284, %v1286
  %v1295 = vsel %vm79, %v1254, 0
  %v1298 = vsel %vm83, %v1288, 0
  %v1301 = vsel %vm83, %v1289, 0
  %v1304 = vsel %vm83, %v1290, 0
  %v1307 = vsel %vm83, %v1291, 0
  %v1310 = vsel %vm83, %v1292, 0
  %v1313 = vsel %vm83, %v1293, 0
  %1315 = vmatpush.bf16.msra.mxu0 0
  %1316 = vmatpush.bf16.msra.mxu0 0
  %1317 = vmatpush.bf16.msra.mxu0 0
  %1318 = vmatpush.bf16.msra.mxu0 0
  %1319 = vmatpush.bf16.msra.mxu0 0
  %1320 = vmatpush.bf16.msra.mxu0 0
  %1321 = vmatpush.bf16.msra.mxu0 0
  %1322 = vmatpush.bf16.msra.mxu0 %v1298
  %1323 = vmatmul.bf16.gmra.mxu0 %v1295
  %v1324 = vpop.f32.mrf.mxu0
  %v1325 = vadd.f32 0.0, %v1324
  %v1326 = vpop.f32.mrf.mxu0
  %1327 = vdwg.mxu0
  %1328 = vmatpush.bf16.msra.mxu0 0
  %1329 = vmatpush.bf16.msra.mxu0 0
  %1330 = vmatpush.bf16.msra.mxu0 0
  %1331 = vmatpush.bf16.msra.mxu0 0
  %1332 = vmatpush.bf16.msra.mxu0 0
  %1333 = vmatpush.bf16.msra.mxu0 0
  %1334 = vmatpush.bf16.msra.mxu0 0
  %1335 = vmatpush.bf16.msra.mxu0 %v1301
  %1336 = vmatmul.bf16.gmra.mxu0 %v1295
  %v1337 = vpop.f32.mrf.mxu0
  %v1338 = vadd.f32 0.0, %v1337
  %v1339 = vpop.f32.mrf.mxu0
  %1340 = vdwg.mxu0
  %1341 = vmatpush.bf16.msra.mxu0 0
  %1342 = vmatpush.bf16.msra.mxu0 0
  %1343 = vmatpush.bf16.msra.mxu0 0
  %1344 = vmatpush.bf16.msra.mxu0 0
  %1345 = vmatpush.bf16.msra.mxu0 0
  %1346 = vmatpush.bf16.msra.mxu0 0
  %1347 = vmatpush.bf16.msra.mxu0 0
  %1348 = vmatpush.bf16.msra.mxu0 %v1304
  %1349 = vmatmul.bf16.gmra.mxu0 %v1295
  %v1350 = vpop.f32.mrf.mxu0
  %v1351 = vadd.f32 0.0, %v1350
  %v1352 = vpop.f32.mrf.mxu0
  %1353 = vdwg.mxu0
  %1354 = vmatpush.bf16.msra.mxu0 0
  %1355 = vmatpush.bf16.msra.mxu0 0
  %1356 = vmatpush.bf16.msra.mxu0 0
  %1357 = vmatpush.bf16.msra.mxu0 0
  %1358 = vmatpush.bf16.msra.mxu0 0
  %1359 = vmatpush.bf16.msra.mxu0 0
  %1360 = vmatpush.bf16.msra.mxu0 0
  %1361 = vmatpush.bf16.msra.mxu0 %v1307
  %1362 = vmatmul.bf16.gmra.mxu0 %v1295
  %v1363 = vpop.f32.mrf.mxu0
  %v1364 = vadd.f32 0.0, %v1363
  %v1365 = vpop.f32.mrf.mxu0
  %1366 = vdwg.mxu0
  %1367 = vmatpush.bf16.msra.mxu0 0
  %1368 = vmatpush.bf16.msra.mxu0 0
  %1369 = vmatpush.bf16.msra.mxu0 0
  %1370 = vmatpush.bf16.msra.mxu0 0
  %1371 = vmatpush.bf16.msra.mxu0 0
  %1372 = vmatpush.bf16.msra.mxu0 0
  %1373 = vmatpush.bf16.msra.mxu0 0
  %1374 = vmatpush.bf16.msra.mxu0 %v1310
  %1375 = vmatmul.bf16.gmra.mxu0 %v1295
  %v1376 = vpop.f32.mrf.mxu0
  %v1377 = vadd.f32 0.0, %v1376
  %v1378 = vpop.f32.mrf.mxu0
  %1379 = vdwg.mxu0
  %1380 = vmatpush.bf16.msra.mxu0 0
  %1381 = vmatpush.bf16.msra.mxu0 0
  %1382 = vmatpush.bf16.msra.mxu0 0
  %1383 = vmatpush.bf16.msra.mxu0 0
  %1384 = vmatpush.bf16.msra.mxu0 0
  %1385 = vmatpush.bf16.msra.mxu0 0
  %1386 = vmatpush.bf16.msra.mxu0 0
  %1387 = vmatpush.bf16.msra.mxu0 %v1313
  %1388 = vmatmul.bf16.gmra.mxu0 %v1295
  %v1389 = vpop.f32.mrf.mxu0
  %v1390 = vadd.f32 0.0, %v1389
  %v1391 = vpop.f32.mrf.mxu0
  %1392 = vdwg.mxu0
  %1393 = vrot.lane.b32.xlu0 %v1266, 19
  %v1394 = vpop.permute.xlu0 %1393
  %1395 = vrot.lane.b32.xlu0 %v1267, 19
  %v1396 = vpop.permute.xlu0 %1395
  %1397 = vrot.lane.b32.xlu0 %v1268, 19
  %v1398 = vpop.permute.xlu0 %1397
  %1399 = vrot.lane.b32.xlu0 %v1269, 19
  %v1400 = vpop.permute.xlu0 %1399
  %1401 = vrot.lane.b32.xlu0 %v1270, 19
  %v1402 = vpop.permute.xlu0 %1401
  %1403 = vrot.lane.b32.xlu0 %v1271, 19
  %v1404 = vpop.permute.xlu0 %1403
  %1405 = vrot.lane.b32.xlu0 %v1272, 19
  %v1406 = vpop.permute.xlu0 %1405
  %vm1407 = vcmask 154624
  %v1408 = vsel %vm1407, %v1394, %v1396
  %v1409 = vsel %vm1407, %v1396, %v1398
  %v1410 = vsel %vm1407, %v1398, %v1400
  %v1411 = vsel %vm1407, %v1400, %v1402
  %v1412 = vsel %vm1407, %v1402, %v1404
  %v1413 = vsel %vm1407, %v1404, %v1406
  %v1415 = vsel %vm79, %v1252, 0
  %v1418 = vsel %vm83, %v1408, 0
  %v1421 = vsel %vm83, %v1409, 0
  %v1424 = vsel %vm83, %v1410, 0
  %v1427 = vsel %vm83, %v1411, 0
  %v1430 = vsel %vm83, %v1412, 0
  %v1433 = vsel %vm83, %v1413, 0
  %1435 = vmatpush.bf16.msra.mxu0 0
  %1436 = vmatpush.bf16.msra.mxu0 0
  %1437 = vmatpush.bf16.msra.mxu0 0
  %1438 = vmatpush.bf16.msra.mxu0 0
  %1439 = vmatpush.bf16.msra.mxu0 0
  %1440 = vmatpush.bf16.msra.mxu0 0
  %1441 = vmatpush.bf16.msra.mxu0 0
  %1442 = vmatpush.bf16.msra.mxu0 %v1418
  %1443 = vmatmul.bf16.gmra.mxu0 %v1415
  %v1444 = vpop.f32.mrf.mxu0
  %v1445 = vadd.f32 %v1325, %v1444
  %v1446 = vpop.f32.mrf.mxu0
  %1447 = vdwg.mxu0
  %1448 = vmatpush.bf16.msra.mxu0 0
  %1449 = vmatpush.bf16.msra.mxu0 0
  %1450 = vmatpush.bf16.msra.mxu0 0
  %1451 = vmatpush.bf16.msra.mxu0 0
  %1452 = vmatpush.bf16.msra.mxu0 0
  %1453 = vmatpush.bf16.msra.mxu0 0
  %1454 = vmatpush.bf16.msra.mxu0 0
  %1455 = vmatpush.bf16.msra.mxu0 %v1421
  %1456 = vmatmul.bf16.gmra.mxu0 %v1415
  %v1457 = vpop.f32.mrf.mxu0
  %v1458 = vadd.f32 %v1338, %v1457
  %v1459 = vpop.f32.mrf.mxu0
  %1460 = vdwg.mxu0
  %1461 = vmatpush.bf16.msra.mxu0 0
  %1462 = vmatpush.bf16.msra.mxu0 0
  %1463 = vmatpush.bf16.msra.mxu0 0
  %1464 = vmatpush.bf16.msra.mxu0 0
  %1465 = vmatpush.bf16.msra.mxu0 0
  %1466 = vmatpush.bf16.msra.mxu0 0
  %1467 = vmatpush.bf16.msra.mxu0 0
  %1468 = vmatpush.bf16.msra.mxu0 %v1424
  %1469 = vmatmul.bf16.gmra.mxu0 %v1415
  %v1470 = vpop.f32.mrf.mxu0
  %v1471 = vadd.f32 %v1351, %v1470
  %v1472 = vpop.f32.mrf.mxu0
  %1473 = vdwg.mxu0
  %1474 = vmatpush.bf16.msra.mxu0 0
  %1475 = vmatpush.bf16.msra.mxu0 0
  %1476 = vmatpush.bf16.msra.mxu0 0
  %1477 = vmatpush.bf16.msra.mxu0 0
  %1478 = vmatpush.bf16.msra.mxu0 0
  %1479 = vmatpush.bf16.msra.mxu0 0
  %1480 = vmatpush.bf16.msra.mxu0 0
  %1481 = vmatpush.bf16.msra.mxu0 %v1427
  %1482 = vmatmul.bf16.gmra.mxu0 %v1415
  %v1483 = vpop.f32.mrf.mxu0
  %v1484 = vadd.f32 %v1364, %v1483
  %v1485 = vpop.f32.mrf.mxu0
  %1486 = vdwg.mxu0
  %1487 = vmatpush.bf16.msra.mxu0 0
  %1488 = vmatpush.bf16.msra.mxu0 0
  %1489 = vmatpush.bf16.msra.mxu0 0
  %1490 = vmatpush.bf16.msra.mxu0 0
  %1491 = vmatpush.bf16.msra.mxu0 0
  %1492 = vmatpush.bf16.msra.mxu0 0
  %1493 = vmatpush.bf16.msra.mxu0 0
  %1494 = vmatpush.bf16.msra.mxu0 %v1430
  %1495 = vmatmul.bf16.gmra.mxu0 %v1415
  %v1496 = vpop.f32.mrf.mxu0
  %v1497 = vadd.f32 %v1377, %v1496
  %v1498 = vpop.f32.mrf.mxu0
  %1499 = vdwg.mxu0
  %1500 = vmatpush.bf16.msra.mxu0 0
  %1501 = vmatpush.bf16.msra.mxu0 0
  %1502 = vmatpush.bf16.msra.mxu0 0
  %1503 = vmatpush.bf16.msra.mxu0 0
  %1504 = vmatpush.bf16.msra.mxu0 0
  %1505 = vmatpush.bf16.msra.mxu0 0
  %1506 = vmatpush.bf16.msra.mxu0 0
  %1507 = vmatpush.bf16.msra.mxu0 %v1433
  %1508 = vmatmul.bf16.gmra.mxu0 %v1415
  %v1509 = vpop.f32.mrf.mxu0
  %v1510 = vadd.f32 %v1390, %v1509
  %v1511 = vpop.f32.mrf.mxu0
  %1512 = vdwg.mxu0
  %s1513 = scalar_lea.vmem %s5, 8
  %v1514 = vld [vmem:[%s1513] sm:$0xf]
  %1515 = vrot.lane.b32.xlu0 %v1266, 17
  %v1516 = vpop.permute.xlu0 %1515
  %1517 = vrot.lane.b32.xlu0 %v1267, 17
  %v1518 = vpop.permute.xlu0 %1517
  %1519 = vrot.lane.b32.xlu0 %v1268, 17
  %v1520 = vpop.permute.xlu0 %1519
  %1521 = vrot.lane.b32.xlu0 %v1269, 17
  %v1522 = vpop.permute.xlu0 %1521
  %1523 = vrot.lane.b32.xlu0 %v1270, 17
  %v1524 = vpop.permute.xlu0 %1523
  %1525 = vrot.lane.b32.xlu0 %v1271, 17
  %v1526 = vpop.permute.xlu0 %1525
  %1527 = vrot.lane.b32.xlu0 %v1272, 17
  %v1528 = vpop.permute.xlu0 %1527
  %vm1529 = vcmask 138240
  %v1530 = vsel %vm1529, %v1516, %v1518
  %v1531 = vsel %vm1529, %v1518, %v1520
  %v1532 = vsel %vm1529, %v1520, %v1522
  %v1533 = vsel %vm1529, %v1522, %v1524
  %v1534 = vsel %vm1529, %v1524, %v1526
  %v1535 = vsel %vm1529, %v1526, %v1528
  %v1537 = vsel %vm79, %v1514, 0
  %v1540 = vsel %vm83, %v1530, 0
  %v1543 = vsel %vm83, %v1531, 0
  %v1546 = vsel %vm83, %v1532, 0
  %v1549 = vsel %vm83, %v1533, 0
  %v1552 = vsel %vm83, %v1534, 0
  %v1555 = vsel %vm83, %v1535, 0
  %1557 = vmatpush.bf16.msra.mxu0 0
  %1558 = vmatpush.bf16.msra.mxu0 0
  %1559 = vmatpush.bf16.msra.mxu0 0
  %1560 = vmatpush.bf16.msra.mxu0 0
  %1561 = vmatpush.bf16.msra.mxu0 0
  %1562 = vmatpush.bf16.msra.mxu0 0
  %1563 = vmatpush.bf16.msra.mxu0 0
  %1564 = vmatpush.bf16.msra.mxu0 %v1540
  %1565 = vmatmul.bf16.gmra.mxu0 %v1537
  %v1566 = vpop.f32.mrf.mxu0
  %v1567 = vadd.f32 0.0, %v1566
  %v1568 = vpop.f32.mrf.mxu0
  %1569 = vdwg.mxu0
  %1570 = vmatpush.bf16.msra.mxu0 0
  %1571 = vmatpush.bf16.msra.mxu0 0
  %1572 = vmatpush.bf16.msra.mxu0 0
  %1573 = vmatpush.bf16.msra.mxu0 0
  %1574 = vmatpush.bf16.msra.mxu0 0
  %1575 = vmatpush.bf16.msra.mxu0 0
  %1576 = vmatpush.bf16.msra.mxu0 0
  %1577 = vmatpush.bf16.msra.mxu0 %v1543
  %1578 = vmatmul.bf16.gmra.mxu0 %v1537
  %v1579 = vpop.f32.mrf.mxu0
  %v1580 = vadd.f32 0.0, %v1579
  %v1581 = vpop.f32.mrf.mxu0
  %1582 = vdwg.mxu0
  %1583 = vmatpush.bf16.msra.mxu0 0
  %1584 = vmatpush.bf16.msra.mxu0 0
  %1585 = vmatpush.bf16.msra.mxu0 0
  %1586 = vmatpush.bf16.msra.mxu0 0
  %1587 = vmatpush.bf16.msra.mxu0 0
  %1588 = vmatpush.bf16.msra.mxu0 0
  %1589 = vmatpush.bf16.msra.mxu0 0
  %1590 = vmatpush.bf16.msra.mxu0 %v1546
  %1591 = vmatmul.bf16.gmra.mxu0 %v1537
  %v1592 = vpop.f32.mrf.mxu0
  %v1593 = vadd.f32 0.0, %v1592
  %v1594 = vpop.f32.mrf.mxu0
  %1595 = vdwg.mxu0
  %1596 = vmatpush.bf16.msra.mxu0 0
  %1597 = vmatpush.bf16.msra.mxu0 0
  %1598 = vmatpush.bf16.msra.mxu0 0
  %1599 = vmatpush.bf16.msra.mxu0 0
  %1600 = vmatpush.bf16.msra.mxu0 0
  %1601 = vmatpush.bf16.msra.mxu0 0
  %1602 = vmatpush.bf16.msra.mxu0 0
  %1603 = vmatpush.bf16.msra.mxu0 %v1549
  %1604 = vmatmul.bf16.gmra.mxu0 %v1537
  %v1605 = vpop.f32.mrf.mxu0
  %v1606 = vadd.f32 0.0, %v1605
  %v1607 = vpop.f32.mrf.mxu0
  %1608 = vdwg.mxu0
  %1609 = vmatpush.bf16.msra.mxu0 0
  %1610 = vmatpush.bf16.msra.mxu0 0
  %1611 = vmatpush.bf16.msra.mxu0 0
  %1612 = vmatpush.bf16.msra.mxu0 0
  %1613 = vmatpush.bf16.msra.mxu0 0
  %1614 = vmatpush.bf16.msra.mxu0 0
  %1615 = vmatpush.bf16.msra.mxu0 0
  %1616 = vmatpush.bf16.msra.mxu0 %v1552
  %1617 = vmatmul.bf16.gmra.mxu0 %v1537
  %v1618 = vpop.f32.mrf.mxu0
  %v1619 = vadd.f32 0.0, %v1618
  %v1620 = vpop.f32.mrf.mxu0
  %1621 = vdwg.mxu0
  %1622 = vmatpush.bf16.msra.mxu0 0
  %1623 = vmatpush.bf16.msra.mxu0 0
  %1624 = vmatpush.bf16.msra.mxu0 0
  %1625 = vmatpush.bf16.msra.mxu0 0
  %1626 = vmatpush.bf16.msra.mxu0 0
  %1627 = vmatpush.bf16.msra.mxu0 0
  %1628 = vmatpush.bf16.msra.mxu0 0
  %1629 = vmatpush.bf16.msra.mxu0 %v1555
  %1630 = vmatmul.bf16.gmra.mxu0 %v1537
  %v1631 = vpop.f32.mrf.mxu0
  %v1632 = vadd.f32 0.0, %v1631
  %v1633 = vpop.f32.mrf.mxu0
  %1634 = vdwg.mxu0
  %v1635 = vadd.f32 %v1445, %v1567
  %v1636 = vadd.f32 %v1458, %v1580
  %v1637 = vadd.f32 %v1471, %v1593
  %v1638 = vadd.f32 %v1484, %v1606
  %v1639 = vadd.f32 %v1497, %v1619
  %v1640 = vadd.f32 %v1510, %v1632
  %s1641 = scalar_lea.vmem %s5, 12
  %v1642 = vld [vmem:[%s1641] sm:$0xf]
  %1643 = vrot.lane.b32.xlu0 %v1266, 1
  %v1644 = vpop.permute.xlu0 %1643
  %1645 = vrot.lane.b32.xlu0 %v1267, 1
  %v1646 = vpop.permute.xlu0 %1645
  %1647 = vrot.lane.b32.xlu0 %v1268, 1
  %v1648 = vpop.permute.xlu0 %1647
  %1649 = vrot.lane.b32.xlu0 %v1269, 1
  %v1650 = vpop.permute.xlu0 %1649
  %1651 = vrot.lane.b32.xlu0 %v1270, 1
  %v1652 = vpop.permute.xlu0 %1651
  %1653 = vrot.lane.b32.xlu0 %v1271, 1
  %v1654 = vpop.permute.xlu0 %1653
  %1655 = vrot.lane.b32.xlu0 %v1272, 1
  %v1656 = vpop.permute.xlu0 %1655
  %vm1657 = vcmask 7168
  %v1658 = vsel %vm1657, %v1644, %v1646
  %v1659 = vsel %vm1657, %v1646, %v1648
  %v1660 = vsel %vm1657, %v1648, %v1650
  %v1661 = vsel %vm1657, %v1650, %v1652
  %v1662 = vsel %vm1657, %v1652, %v1654
  %v1663 = vsel %vm1657, %v1654, %v1656
  %v1665 = vsel %vm79, %v1642, 0
  %v1668 = vsel %vm83, %v1658, 0
  %v1671 = vsel %vm83, %v1659, 0
  %v1674 = vsel %vm83, %v1660, 0
  %v1677 = vsel %vm83, %v1661, 0
  %v1680 = vsel %vm83, %v1662, 0
  %v1683 = vsel %vm83, %v1663, 0
  %1685 = vmatpush.bf16.msra.mxu0 0
  %1686 = vmatpush.bf16.msra.mxu0 0
  %1687 = vmatpush.bf16.msra.mxu0 0
  %1688 = vmatpush.bf16.msra.mxu0 0
  %1689 = vmatpush.bf16.msra.mxu0 0
  %1690 = vmatpush.bf16.msra.mxu0 0
  %1691 = vmatpush.bf16.msra.mxu0 0
  %1692 = vmatpush.bf16.msra.mxu0 %v1668
  %1693 = vmatmul.bf16.gmra.mxu0 %v1665
  %v1694 = vpop.f32.mrf.mxu0
  %v1695 = vadd.f32 0.0, %v1694
  %v1696 = vpop.f32.mrf.mxu0
  %1697 = vdwg.mxu0
  %1698 = vmatpush.bf16.msra.mxu0 0
  %1699 = vmatpush.bf16.msra.mxu0 0
  %1700 = vmatpush.bf16.msra.mxu0 0
  %1701 = vmatpush.bf16.msra.mxu0 0
  %1702 = vmatpush.bf16.msra.mxu0 0
  %1703 = vmatpush.bf16.msra.mxu0 0
  %1704 = vmatpush.bf16.msra.mxu0 0
  %1705 = vmatpush.bf16.msra.mxu0 %v1671
  %1706 = vmatmul.bf16.gmra.mxu0 %v1665
  %v1707 = vpop.f32.mrf.mxu0
  %v1708 = vadd.f32 0.0, %v1707
  %v1709 = vpop.f32.mrf.mxu0
  %1710 = vdwg.mxu0
  %1711 = vmatpush.bf16.msra.mxu0 0
  %1712 = vmatpush.bf16.msra.mxu0 0
  %1713 = vmatpush.bf16.msra.mxu0 0
  %1714 = vmatpush.bf16.msra.mxu0 0
  %1715 = vmatpush.bf16.msra.mxu0 0
  %1716 = vmatpush.bf16.msra.mxu0 0
  %1717 = vmatpush.bf16.msra.mxu0 0
  %1718 = vmatpush.bf16.msra.mxu0 %v1674
  %1719 = vmatmul.bf16.gmra.mxu0 %v1665
  %v1720 = vpop.f32.mrf.mxu0
  %v1721 = vadd.f32 0.0, %v1720
  %v1722 = vpop.f32.mrf.mxu0
  %1723 = vdwg.mxu0
  %1724 = vmatpush.bf16.msra.mxu0 0
  %1725 = vmatpush.bf16.msra.mxu0 0
  %1726 = vmatpush.bf16.msra.mxu0 0
  %1727 = vmatpush.bf16.msra.mxu0 0
  %1728 = vmatpush.bf16.msra.mxu0 0
  %1729 = vmatpush.bf16.msra.mxu0 0
  %1730 = vmatpush.bf16.msra.mxu0 0
  %1731 = vmatpush.bf16.msra.mxu0 %v1677
  %1732 = vmatmul.bf16.gmra.mxu0 %v1665
  %v1733 = vpop.f32.mrf.mxu0
  %v1734 = vadd.f32 0.0, %v1733
  %v1735 = vpop.f32.mrf.mxu0
  %1736 = vdwg.mxu0
  %1737 = vmatpush.bf16.msra.mxu0 0
  %1738 = vmatpush.bf16.msra.mxu0 0
  %1739 = vmatpush.bf16.msra.mxu0 0
  %1740 = vmatpush.bf16.msra.mxu0 0
  %1741 = vmatpush.bf16.msra.mxu0 0
  %1742 = vmatpush.bf16.msra.mxu0 0
  %1743 = vmatpush.bf16.msra.mxu0 0
  %1744 = vmatpush.bf16.msra.mxu0 %v1680
  %1745 = vmatmul.bf16.gmra.mxu0 %v1665
  %v1746 = vpop.f32.mrf.mxu0
  %v1747 = vadd.f32 0.0, %v1746
  %v1748 = vpop.f32.mrf.mxu0
  %1749 = vdwg.mxu0
  %1750 = vmatpush.bf16.msra.mxu0 0
  %1751 = vmatpush.bf16.msra.mxu0 0
  %1752 = vmatpush.bf16.msra.mxu0 0
  %1753 = vmatpush.bf16.msra.mxu0 0
  %1754 = vmatpush.bf16.msra.mxu0 0
  %1755 = vmatpush.bf16.msra.mxu0 0
  %1756 = vmatpush.bf16.msra.mxu0 0
  %1757 = vmatpush.bf16.msra.mxu0 %v1683
  %1758 = vmatmul.bf16.gmra.mxu0 %v1665
  %v1759 = vpop.f32.mrf.mxu0
  %v1760 = vadd.f32 0.0, %v1759
  %v1761 = vpop.f32.mrf.mxu0
  %1762 = vdwg.mxu0
  %v1763 = vadd.f32 %v1635, %v1695
  %v1764 = vadd.f32 %v1636, %v1708
  %v1765 = vadd.f32 %v1637, %v1721
  %v1766 = vadd.f32 %v1638, %v1734
  %v1767 = vadd.f32 %v1639, %v1747
  %v1768 = vadd.f32 %v1640, %v1760
  %v1769 = vld [vmem:[#allocation2 + $0x4] sm:$0xff]
  %v1770 = vld [vmem:[#allocation2 + $0xc] sm:$0xff]
  %v1771 = vld [vmem:[#allocation2 + $0x14] sm:$0xff]
  %s1772 = scalar_lea.vmem %s5, 16
  %v1773 = vld [vmem:[%s1772] sm:$0xf]
  %v1777 = vunpack.c.l.b16 %v1769
  %v1778 = vunpack.c.h.b16 %v1769
  %v1779 = vunpack.c.l.b16 %v1770
  %v1780 = vunpack.c.h.b16 %v1770
  %v1781 = vunpack.c.l.b16 %v1771
  %v1782 = vunpack.c.h.b16 %v1771
  %v1783 = vpack.c.b16 %v1777, %v1777
  %v1784 = vpack.c.b16 %v1778, %v1778
  %v1785 = vpack.c.b16 %v1779, %v1779
  %v1786 = vpack.c.b16 %v1780, %v1780
  %v1787 = vpack.c.b16 %v1781, %v1781
  %v1788 = vpack.c.b16 %v1782, %v1782
  %v1790 = vsel %vm79, %v1773, 0
  %v1793 = vsel %vm83, %v1783, 0
  %v1796 = vsel %vm83, %v1784, 0
  %v1799 = vsel %vm83, %v1785, 0
  %v1802 = vsel %vm83, %v1786, 0
  %v1805 = vsel %vm83, %v1787, 0
  %v1808 = vsel %vm83, %v1788, 0
  %1810 = vmatpush.bf16.msra.mxu0 0
  %1811 = vmatpush.bf16.msra.mxu0 0
  %1812 = vmatpush.bf16.msra.mxu0 0
  %1813 = vmatpush.bf16.msra.mxu0 0
  %1814 = vmatpush.bf16.msra.mxu0 0
  %1815 = vmatpush.bf16.msra.mxu0 0
  %1816 = vmatpush.bf16.msra.mxu0 0
  %1817 = vmatpush.bf16.msra.mxu0 %v1793
  %1818 = vmatmul.bf16.gmra.mxu0 %v1790
  %v1819 = vpop.f32.mrf.mxu0
  %v1820 = vadd.f32 0.0, %v1819
  %v1821 = vpop.f32.mrf.mxu0
  %1822 = vdwg.mxu0
  %1823 = vmatpush.bf16.msra.mxu0 0
  %1824 = vmatpush.bf16.msra.mxu0 0
  %1825 = vmatpush.bf16.msra.mxu0 0
  %1826 = vmatpush.bf16.msra.mxu0 0
  %1827 = vmatpush.bf16.msra.mxu0 0
  %1828 = vmatpush.bf16.msra.mxu0 0
  %1829 = vmatpush.bf16.msra.mxu0 0
  %1830 = vmatpush.bf16.msra.mxu0 %v1796
  %1831 = vmatmul.bf16.gmra.mxu0 %v1790
  %v1832 = vpop.f32.mrf.mxu0
  %v1833 = vadd.f32 0.0, %v1832
  %v1834 = vpop.f32.mrf.mxu0
  %1835 = vdwg.mxu0
  %1836 = vmatpush.bf16.msra.mxu0 0
  %1837 = vmatpush.bf16.msra.mxu0 0
  %1838 = vmatpush.bf16.msra.mxu0 0
  %1839 = vmatpush.bf16.msra.mxu0 0
  %1840 = vmatpush.bf16.msra.mxu0 0
  %1841 = vmatpush.bf16.msra.mxu0 0
  %1842 = vmatpush.bf16.msra.mxu0 0
  %1843 = vmatpush.bf16.msra.mxu0 %v1799
  %1844 = vmatmul.bf16.gmra.mxu0 %v1790
  %v1845 = vpop.f32.mrf.mxu0
  %v1846 = vadd.f32 0.0, %v1845
  %v1847 = vpop.f32.mrf.mxu0
  %1848 = vdwg.mxu0
  %1849 = vmatpush.bf16.msra.mxu0 0
  %1850 = vmatpush.bf16.msra.mxu0 0
  %1851 = vmatpush.bf16.msra.mxu0 0
  %1852 = vmatpush.bf16.msra.mxu0 0
  %1853 = vmatpush.bf16.msra.mxu0 0
  %1854 = vmatpush.bf16.msra.mxu0 0
  %1855 = vmatpush.bf16.msra.mxu0 0
  %1856 = vmatpush.bf16.msra.mxu0 %v1802
  %1857 = vmatmul.bf16.gmra.mxu0 %v1790
  %v1858 = vpop.f32.mrf.mxu0
  %v1859 = vadd.f32 0.0, %v1858
  %v1860 = vpop.f32.mrf.mxu0
  %1861 = vdwg.mxu0
  %1862 = vmatpush.bf16.msra.mxu0 0
  %1863 = vmatpush.bf16.msra.mxu0 0
  %1864 = vmatpush.bf16.msra.mxu0 0
  %1865 = vmatpush.bf16.msra.mxu0 0
  %1866 = vmatpush.bf16.msra.mxu0 0
  %1867 = vmatpush.bf16.msra.mxu0 0
  %1868 = vmatpush.bf16.msra.mxu0 0
  %1869 = vmatpush.bf16.msra.mxu0 %v1805
  %1870 = vmatmul.bf16.gmra.mxu0 %v1790
  %v1871 = vpop.f32.mrf.mxu0
  %v1872 = vadd.f32 0.0, %v1871
  %v1873 = vpop.f32.mrf.mxu0
  %1874 = vdwg.mxu0
  %1875 = vmatpush.bf16.msra.mxu0 0
  %1876 = vmatpush.bf16.msra.mxu0 0
  %1877 = vmatpush.bf16.msra.mxu0 0
  %1878 = vmatpush.bf16.msra.mxu0 0
  %1879 = vmatpush.bf16.msra.mxu0 0
  %1880 = vmatpush.bf16.msra.mxu0 0
  %1881 = vmatpush.bf16.msra.mxu0 0
  %1882 = vmatpush.bf16.msra.mxu0 %v1808
  %1883 = vmatmul.bf16.gmra.mxu0 %v1790
  %v1884 = vpop.f32.mrf.mxu0
  %v1885 = vadd.f32 0.0, %v1884
  %v1886 = vpop.f32.mrf.mxu0
  %1887 = vdwg.mxu0
  %v1888 = vadd.f32 %v1763, %v1820
  %v1889 = vadd.f32 %v1764, %v1833
  %v1890 = vadd.f32 %v1765, %v1846
  %v1891 = vadd.f32 %v1766, %v1859
  %v1892 = vadd.f32 %v1767, %v1872
  %v1893 = vadd.f32 %v1768, %v1885
  %v1894 = vld [vmem:[#allocation2 + $0x4] sm:$0xff]
  %v1895 = vld [vmem:[#allocation2 + $0xc] sm:$0xff]
  %v1896 = vld [vmem:[#allocation2 + $0x14] sm:$0xff]
  %v1897 = vld [vmem:[#allocation2 + $0x1c] sm:$0xf]
  %s1898 = scalar_lea.vmem %s5, 20
  %v1899 = vld [vmem:[%s1898] sm:$0xf]
  %v1904 = vunpack.c.l.b16 %v1894
  %v1905 = vunpack.c.h.b16 %v1894
  %v1906 = vunpack.c.l.b16 %v1895
  %v1907 = vunpack.c.h.b16 %v1895
  %v1908 = vunpack.c.l.b16 %v1896
  %v1909 = vunpack.c.h.b16 %v1896
  %v1910 = vunpack.c.l.b16 %v1897
  %v1911 = vpack.c.b16 %v1904, %v1904
  %v1912 = vpack.c.b16 %v1905, %v1905
  %v1913 = vpack.c.b16 %v1906, %v1906
  %v1914 = vpack.c.b16 %v1907, %v1907
  %v1915 = vpack.c.b16 %v1908, %v1908
  %v1916 = vpack.c.b16 %v1909, %v1909
  %v1917 = vpack.c.b16 %v1910, %v1910
  %1918 = vrot.lane.b32.xlu0 %v1911, 127
  %v1919 = vpop.permute.xlu0 %1918
  %1920 = vrot.lane.b32.xlu0 %v1912, 127
  %v1921 = vpop.permute.xlu0 %1920
  %1922 = vrot.lane.b32.xlu0 %v1913, 127
  %v1923 = vpop.permute.xlu0 %1922
  %1924 = vrot.lane.b32.xlu0 %v1914, 127
  %v1925 = vpop.permute.xlu0 %1924
  %1926 = vrot.lane.b32.xlu0 %v1915, 127
  %v1927 = vpop.permute.xlu0 %1926
  %1928 = vrot.lane.b32.xlu0 %v1916, 127
  %v1929 = vpop.permute.xlu0 %1928
  %1930 = vrot.lane.b32.xlu0 %v1917, 127
  %v1931 = vpop.permute.xlu0 %1930
  %v1932 = vsel %vm72, %v1919, %v1921
  %v1933 = vsel %vm72, %v1921, %v1923
  %v1934 = vsel %vm72, %v1923, %v1925
  %v1935 = vsel %vm72, %v1925, %v1927
  %v1936 = vsel %vm72, %v1927, %v1929
  %v1937 = vsel %vm72, %v1929, %v1931
  %v1939 = vsel %vm79, %v1899, 0
  %v1942 = vsel %vm83, %v1932, 0
  %v1945 = vsel %vm83, %v1933, 0
  %v1948 = vsel %vm83, %v1934, 0
  %v1951 = vsel %vm83, %v1935, 0
  %v1954 = vsel %vm83, %v1936, 0
  %v1957 = vsel %vm83, %v1937, 0
  %1959 = vmatpush.bf16.msra.mxu0 0
  %1960 = vmatpush.bf16.msra.mxu0 0
  %1961 = vmatpush.bf16.msra.mxu0 0
  %1962 = vmatpush.bf16.msra.mxu0 0
  %1963 = vmatpush.bf16.msra.mxu0 0
  %1964 = vmatpush.bf16.msra.mxu0 0
  %1965 = vmatpush.bf16.msra.mxu0 0
  %1966 = vmatpush.bf16.msra.mxu0 %v1942
  %1967 = vmatmul.bf16.gmra.mxu0 %v1939
  %v1968 = vpop.f32.mrf.mxu0
  %v1969 = vadd.f32 0.0, %v1968
  %v1970 = vpop.f32.mrf.mxu0
  %1971 = vdwg.mxu0
  %1972 = vmatpush.bf16.msra.mxu0 0
  %1973 = vmatpush.bf16.msra.mxu0 0
  %1974 = vmatpush.bf16.msra.mxu0 0
  %1975 = vmatpush.bf16.msra.mxu0 0
  %1976 = vmatpush.bf16.msra.mxu0 0
  %1977 = vmatpush.bf16.msra.mxu0 0
  %1978 = vmatpush.bf16.msra.mxu0 0
  %1979 = vmatpush.bf16.msra.mxu0 %v1945
  %1980 = vmatmul.bf16.gmra.mxu0 %v1939
  %v1981 = vpop.f32.mrf.mxu0
  %v1982 = vadd.f32 0.0, %v1981
  %v1983 = vpop.f32.mrf.mxu0
  %1984 = vdwg.mxu0
  %1985 = vmatpush.bf16.msra.mxu0 0
  %1986 = vmatpush.bf16.msra.mxu0 0
  %1987 = vmatpush.bf16.msra.mxu0 0
  %1988 = vmatpush.bf16.msra.mxu0 0
  %1989 = vmatpush.bf16.msra.mxu0 0
  %1990 = vmatpush.bf16.msra.mxu0 0
  %1991 = vmatpush.bf16.msra.mxu0 0
  %1992 = vmatpush.bf16.msra.mxu0 %v1948
  %1993 = vmatmul.bf16.gmra.mxu0 %v1939
  %v1994 = vpop.f32.mrf.mxu0
  %v1995 = vadd.f32 0.0, %v1994
  %v1996 = vpop.f32.mrf.mxu0
  %1997 = vdwg.mxu0
  %1998 = vmatpush.bf16.msra.mxu0 0
  %1999 = vmatpush.bf16.msra.mxu0 0
  %2000 = vmatpush.bf16.msra.mxu0 0
  %2001 = vmatpush.bf16.msra.mxu0 0
  %2002 = vmatpush.bf16.msra.mxu0 0
  %2003 = vmatpush.bf16.msra.mxu0 0
  %2004 = vmatpush.bf16.msra.mxu0 0
  %2005 = vmatpush.bf16.msra.mxu0 %v1951
  %2006 = vmatmul.bf16.gmra.mxu0 %v1939
  %v2007 = vpop.f32.mrf.mxu0
  %v2008 = vadd.f32 0.0, %v2007
  %v2009 = vpop.f32.mrf.mxu0
  %2010 = vdwg.mxu0
  %2011 = vmatpush.bf16.msra.mxu0 0
  %2012 = vmatpush.bf16.msra.mxu0 0
  %2013 = vmatpush.bf16.msra.mxu0 0
  %2014 = vmatpush.bf16.msra.mxu0 0
  %2015 = vmatpush.bf16.msra.mxu0 0
  %2016 = vmatpush.bf16.msra.mxu0 0
  %2017 = vmatpush.bf16.msra.mxu0 0
  %2018 = vmatpush.bf16.msra.mxu0 %v1954
  %2019 = vmatmul.bf16.gmra.mxu0 %v1939
  %v2020 = vpop.f32.mrf.mxu0
  %v2021 = vadd.f32 0.0, %v2020
  %v2022 = vpop.f32.mrf.mxu0
  %2023 = vdwg.mxu0
  %2024 = vmatpush.bf16.msra.mxu0 0
  %2025 = vmatpush.bf16.msra.mxu0 0
  %2026 = vmatpush.bf16.msra.mxu0 0
  %2027 = vmatpush.bf16.msra.mxu0 0
  %2028 = vmatpush.bf16.msra.mxu0 0
  %2029 = vmatpush.bf16.msra.mxu0 0
  %2030 = vmatpush.bf16.msra.mxu0 0
  %2031 = vmatpush.bf16.msra.mxu0 %v1957
  %2032 = vmatmul.bf16.gmra.mxu0 %v1939
  %v2033 = vpop.f32.mrf.mxu0
  %v2034 = vadd.f32 0.0, %v2033
  %v2035 = vpop.f32.mrf.mxu0
  %2036 = vdwg.mxu0
  %v2037 = vadd.f32 %v1888, %v1969
  %v2038 = vadd.f32 %v1889, %v1982
  %v2039 = vadd.f32 %v1890, %v1995
  %v2040 = vadd.f32 %v1891, %v2008
  %v2041 = vadd.f32 %v1892, %v2021
  %v2042 = vadd.f32 %v1893, %v2034
  %s2043 = scalar_lea.vmem %s5, 24
  %v2044 = vld [vmem:[%s2043] sm:$0xf]
  %2045 = vrot.lane.b32.xlu0 %v1911, 111
  %v2046 = vpop.permute.xlu0 %2045
  %2047 = vrot.lane.b32.xlu0 %v1912, 111
  %v2048 = vpop.permute.xlu0 %2047
  %2049 = vrot.lane.b32.xlu0 %v1913, 111
  %v2050 = vpop.permute.xlu0 %2049
  %2051 = vrot.lane.b32.xlu0 %v1914, 111
  %v2052 = vpop.permute.xlu0 %2051
  %2053 = vrot.lane.b32.xlu0 %v1915, 111
  %v2054 = vpop.permute.xlu0 %2053
  %2055 = vrot.lane.b32.xlu0 %v1916, 111
  %v2056 = vpop.permute.xlu0 %2055
  %2057 = vrot.lane.b32.xlu0 %v1917, 111
  %v2058 = vpop.permute.xlu0 %2057
  %vm2059 = vcmask 908288
  %v2060 = vsel %vm2059, %v2046, %v2048
  %v2061 = vsel %vm2059, %v2048, %v2050
  %v2062 = vsel %vm2059, %v2050, %v2052
  %v2063 = vsel %vm2059, %v2052, %v2054
  %v2064 = vsel %vm2059, %v2054, %v2056
  %v2065 = vsel %vm2059, %v2056, %v2058
  %v2067 = vsel %vm79, %v2044, 0
  %v2070 = vsel %vm83, %v2060, 0
  %v2073 = vsel %vm83, %v2061, 0
  %v2076 = vsel %vm83, %v2062, 0
  %v2079 = vsel %vm83, %v2063, 0
  %v2082 = vsel %vm83, %v2064, 0
  %v2085 = vsel %vm83, %v2065, 0
  %2087 = vmatpush.bf16.msra.mxu0 0
  %2088 = vmatpush.bf16.msra.mxu0 0
  %2089 = vmatpush.bf16.msra.mxu0 0
  %2090 = vmatpush.bf16.msra.mxu0 0
  %2091 = vmatpush.bf16.msra.mxu0 0
  %2092 = vmatpush.bf16.msra.mxu0 0
  %2093 = vmatpush.bf16.msra.mxu0 0
  %2094 = vmatpush.bf16.msra.mxu0 %v2070
  %2095 = vmatmul.bf16.gmra.mxu0 %v2067
  %v2096 = vpop.f32.mrf.mxu0
  %v2097 = vadd.f32 0.0, %v2096
  %v2098 = vpop.f32.mrf.mxu0
  %2099 = vdwg.mxu0
  %2100 = vmatpush.bf16.msra.mxu0 0
  %2101 = vmatpush.bf16.msra.mxu0 0
  %2102 = vmatpush.bf16.msra.mxu0 0
  %2103 = vmatpush.bf16.msra.mxu0 0
  %2104 = vmatpush.bf16.msra.mxu0 0
  %2105 = vmatpush.bf16.msra.mxu0 0
  %2106 = vmatpush.bf16.msra.mxu0 0
  %2107 = vmatpush.bf16.msra.mxu0 %v2073
  %2108 = vmatmul.bf16.gmra.mxu0 %v2067
  %v2109 = vpop.f32.mrf.mxu0
  %v2110 = vadd.f32 0.0, %v2109
  %v2111 = vpop.f32.mrf.mxu0
  %2112 = vdwg.mxu0
  %2113 = vmatpush.bf16.msra.mxu0 0
  %2114 = vmatpush.bf16.msra.mxu0 0
  %2115 = vmatpush.bf16.msra.mxu0 0
  %2116 = vmatpush.bf16.msra.mxu0 0
  %2117 = vmatpush.bf16.msra.mxu0 0
  %2118 = vmatpush.bf16.msra.mxu0 0
  %2119 = vmatpush.bf16.msra.mxu0 0
  %2120 = vmatpush.bf16.msra.mxu0 %v2076
  %2121 = vmatmul.bf16.gmra.mxu0 %v2067
  %v2122 = vpop.f32.mrf.mxu0
  %v2123 = vadd.f32 0.0, %v2122
  %v2124 = vpop.f32.mrf.mxu0
  %2125 = vdwg.mxu0
  %2126 = vmatpush.bf16.msra.mxu0 0
  %2127 = vmatpush.bf16.msra.mxu0 0
  %2128 = vmatpush.bf16.msra.mxu0 0
  %2129 = vmatpush.bf16.msra.mxu0 0
  %2130 = vmatpush.bf16.msra.mxu0 0
  %2131 = vmatpush.bf16.msra.mxu0 0
  %2132 = vmatpush.bf16.msra.mxu0 0
  %2133 = vmatpush.bf16.msra.mxu0 %v2079
  %2134 = vmatmul.bf16.gmra.mxu0 %v2067
  %v2135 = vpop.f32.mrf.mxu0
  %v2136 = vadd.f32 0.0, %v2135
  %v2137 = vpop.f32.mrf.mxu0
  %2138 = vdwg.mxu0
  %2139 = vmatpush.bf16.msra.mxu0 0
  %2140 = vmatpush.bf16.msra.mxu0 0
  %2141 = vmatpush.bf16.msra.mxu0 0
  %2142 = vmatpush.bf16.msra.mxu0 0
  %2143 = vmatpush.bf16.msra.mxu0 0
  %2144 = vmatpush.bf16.msra.mxu0 0
  %2145 = vmatpush.bf16.msra.mxu0 0
  %2146 = vmatpush.bf16.msra.mxu0 %v2082
  %2147 = vmatmul.bf16.gmra.mxu0 %v2067
  %v2148 = vpop.f32.mrf.mxu0
  %v2149 = vadd.f32 0.0, %v2148
  %v2150 = vpop.f32.mrf.mxu0
  %2151 = vdwg.mxu0
  %2152 = vmatpush.bf16.msra.mxu0 0
  %2153 = vmatpush.bf16.msra.mxu0 0
  %2154 = vmatpush.bf16.msra.mxu0 0
  %2155 = vmatpush.bf16.msra.mxu0 0
  %2156 = vmatpush.bf16.msra.mxu0 0
  %2157 = vmatpush.bf16.msra.mxu0 0
  %2158 = vmatpush.bf16.msra.mxu0 0
  %2159 = vmatpush.bf16.msra.mxu0 %v2085
  %2160 = vmatmul.bf16.gmra.mxu0 %v2067
  %v2161 = vpop.f32.mrf.mxu0
  %v2162 = vadd.f32 0.0, %v2161
  %v2163 = vpop.f32.mrf.mxu0
  %2164 = vdwg.mxu0
  %v2165 = vadd.f32 %v2037, %v2097
  %v2166 = vadd.f32 %v2038, %v2110
  %v2167 = vadd.f32 %v2039, %v2123
  %v2168 = vadd.f32 %v2040, %v2136
  %v2169 = vadd.f32 %v2041, %v2149
  %v2170 = vadd.f32 %v2042, %v2162
  %s2171 = scalar_lea.vmem %s5, 28
  %v2172 = vld [vmem:[%s2171] sm:$0xf]
  %2173 = vrot.lane.b32.xlu0 %v1911, 110
  %v2174 = vpop.permute.xlu0 %2173
  %2175 = vrot.lane.b32.xlu0 %v1912, 110
  %v2176 = vpop.permute.xlu0 %2175
  %2177 = vrot.lane.b32.xlu0 %v1913, 110
  %v2178 = vpop.permute.xlu0 %2177
  %2179 = vrot.lane.b32.xlu0 %v1914, 110
  %v2180 = vpop.permute.xlu0 %2179
  %2181 = vrot.lane.b32.xlu0 %v1915, 110
  %v2182 = vpop.permute.xlu0 %2181
  %2183 = vrot.lane.b32.xlu0 %v1916, 110
  %v2184 = vpop.permute.xlu0 %2183
  %2185 = vrot.lane.b32.xlu0 %v1917, 110
  %v2186 = vpop.permute.xlu0 %2185
  %v2187 = vsel %vm438, %v2174, %v2176
  %v2188 = vsel %vm438, %v2176, %v2178
  %v2189 = vsel %vm438, %v2178, %v2180
  %v2190 = vsel %vm438, %v2180, %v2182
  %v2191 = vsel %vm438, %v2182, %v2184
  %v2192 = vsel %vm438, %v2184, %v2186
  %v2194 = vsel %vm79, %v2172, 0
  %v2197 = vsel %vm83, %v2187, 0
  %v2200 = vsel %vm83, %v2188, 0
  %v2203 = vsel %vm83, %v2189, 0
  %v2206 = vsel %vm83, %v2190, 0
  %v2209 = vsel %vm83, %v2191, 0
  %v2212 = vsel %vm83, %v2192, 0
  %2214 = vmatpush.bf16.msra.mxu0 0
  %2215 = vmatpush.bf16.msra.mxu0 0
  %2216 = vmatpush.bf16.msra.mxu0 0
  %2217 = vmatpush.bf16.msra.mxu0 0
  %2218 = vmatpush.bf16.msra.mxu0 0
  %2219 = vmatpush.bf16.msra.mxu0 0
  %2220 = vmatpush.bf16.msra.mxu0 0
  %2221 = vmatpush.bf16.msra.mxu0 %v2197
  %2222 = vmatmul.bf16.gmra.mxu0 %v2194
  %v2223 = vpop.f32.mrf.mxu0
  %v2224 = vadd.f32 0.0, %v2223
  %v2225 = vpop.f32.mrf.mxu0
  %2226 = vdwg.mxu0
  %2227 = vmatpush.bf16.msra.mxu0 0
  %2228 = vmatpush.bf16.msra.mxu0 0
  %2229 = vmatpush.bf16.msra.mxu0 0
  %2230 = vmatpush.bf16.msra.mxu0 0
  %2231 = vmatpush.bf16.msra.mxu0 0
  %2232 = vmatpush.bf16.msra.mxu0 0
  %2233 = vmatpush.bf16.msra.mxu0 0
  %2234 = vmatpush.bf16.msra.mxu0 %v2200
  %2235 = vmatmul.bf16.gmra.mxu0 %v2194
  %v2236 = vpop.f32.mrf.mxu0
  %v2237 = vadd.f32 0.0, %v2236
  %v2238 = vpop.f32.mrf.mxu0
  %2239 = vdwg.mxu0
  %2240 = vmatpush.bf16.msra.mxu0 0
  %2241 = vmatpush.bf16.msra.mxu0 0
  %2242 = vmatpush.bf16.msra.mxu0 0
  %2243 = vmatpush.bf16.msra.mxu0 0
  %2244 = vmatpush.bf16.msra.mxu0 0
  %2245 = vmatpush.bf16.msra.mxu0 0
  %2246 = vmatpush.bf16.msra.mxu0 0
  %2247 = vmatpush.bf16.msra.mxu0 %v2203
  %2248 = vmatmul.bf16.gmra.mxu0 %v2194
  %v2249 = vpop.f32.mrf.mxu0
  %v2250 = vadd.f32 0.0, %v2249
  %v2251 = vpop.f32.mrf.mxu0
  %2252 = vdwg.mxu0
  %2253 = vmatpush.bf16.msra.mxu0 0
  %2254 = vmatpush.bf16.msra.mxu0 0
  %2255 = vmatpush.bf16.msra.mxu0 0
  %2256 = vmatpush.bf16.msra.mxu0 0
  %2257 = vmatpush.bf16.msra.mxu0 0
  %2258 = vmatpush.bf16.msra.mxu0 0
  %2259 = vmatpush.bf16.msra.mxu0 0
  %2260 = vmatpush.bf16.msra.mxu0 %v2206
  %2261 = vmatmul.bf16.gmra.mxu0 %v2194
  %v2262 = vpop.f32.mrf.mxu0
  %v2263 = vadd.f32 0.0, %v2262
  %v2264 = vpop.f32.mrf.mxu0
  %2265 = vdwg.mxu0
  %2266 = vmatpush.bf16.msra.mxu0 0
  %2267 = vmatpush.bf16.msra.mxu0 0
  %2268 = vmatpush.bf16.msra.mxu0 0
  %2269 = vmatpush.bf16.msra.mxu0 0
  %2270 = vmatpush.bf16.msra.mxu0 0
  %2271 = vmatpush.bf16.msra.mxu0 0
  %2272 = vmatpush.bf16.msra.mxu0 0
  %2273 = vmatpush.bf16.msra.mxu0 %v2209
  %2274 = vmatmul.bf16.gmra.mxu0 %v2194
  %v2275 = vpop.f32.mrf.mxu0
  %v2276 = vadd.f32 0.0, %v2275
  %v2277 = vpop.f32.mrf.mxu0
  %2278 = vdwg.mxu0
  %2279 = vmatpush.bf16.msra.mxu0 0
  %2280 = vmatpush.bf16.msra.mxu0 0
  %2281 = vmatpush.bf16.msra.mxu0 0
  %2282 = vmatpush.bf16.msra.mxu0 0
  %2283 = vmatpush.bf16.msra.mxu0 0
  %2284 = vmatpush.bf16.msra.mxu0 0
  %2285 = vmatpush.bf16.msra.mxu0 0
  %2286 = vmatpush.bf16.msra.mxu0 %v2212
  %2287 = vmatmul.bf16.gmra.mxu0 %v2194
  %v2288 = vpop.f32.mrf.mxu0
  %v2289 = vadd.f32 0.0, %v2288
  %v2290 = vpop.f32.mrf.mxu0
  %2291 = vdwg.mxu0
  %v2292 = vadd.f32 %v2165, %v2224
  %v2293 = vadd.f32 %v2166, %v2237
  %v2294 = vadd.f32 %v2167, %v2250
  %v2295 = vadd.f32 %v2168, %v2263
  %v2296 = vadd.f32 %v2169, %v2276
  %v2297 = vadd.f32 %v2170, %v2289
  %s2298 = scalar_lea.vmem %s5, 32
  %v2299 = vld [vmem:[%s2298] sm:$0xf]
  %2300 = vrot.lane.b32.xlu0 %v1911, 109
  %v2301 = vpop.permute.xlu0 %2300
  %2302 = vrot.lane.b32.xlu0 %v1912, 109
  %v2303 = vpop.permute.xlu0 %2302
  %2304 = vrot.lane.b32.xlu0 %v1913, 109
  %v2305 = vpop.permute.xlu0 %2304
  %2306 = vrot.lane.b32.xlu0 %v1914, 109
  %v2307 = vpop.permute.xlu0 %2306
  %2308 = vrot.lane.b32.xlu0 %v1915, 109
  %v2309 = vpop.permute.xlu0 %2308
  %2310 = vrot.lane.b32.xlu0 %v1916, 109
  %v2311 = vpop.permute.xlu0 %2310
  %2312 = vrot.lane.b32.xlu0 %v1917, 109
  %v2313 = vpop.permute.xlu0 %2312
  %v2314 = vsel %vm566, %v2301, %v2303
  %v2315 = vsel %vm566, %v2303, %v2305
  %v2316 = vsel %vm566, %v2305, %v2307
  %v2317 = vsel %vm566, %v2307, %v2309
  %v2318 = vsel %vm566, %v2309, %v2311
  %v2319 = vsel %vm566, %v2311, %v2313
  %v2321 = vsel %vm79, %v2299, 0
  %v2324 = vsel %vm83, %v2314, 0
  %v2327 = vsel %vm83, %v2315, 0
  %v2330 = vsel %vm83, %v2316, 0
  %v2333 = vsel %vm83, %v2317, 0
  %v2336 = vsel %vm83, %v2318, 0
  %v2339 = vsel %vm83, %v2319, 0
  %2341 = vmatpush.bf16.msra.mxu0 0
  %2342 = vmatpush.bf16.msra.mxu0 0
  %2343 = vmatpush.bf16.msra.mxu0 0
  %2344 = vmatpush.bf16.msra.mxu0 0
  %2345 = vmatpush.bf16.msra.mxu0 0
  %2346 = vmatpush.bf16.msra.mxu0 0
  %2347 = vmatpush.bf16.msra.mxu0 0
  %2348 = vmatpush.bf16.msra.mxu0 %v2324
  %2349 = vmatmul.bf16.gmra.mxu0 %v2321
  %v2350 = vpop.f32.mrf.mxu0
  %v2351 = vadd.f32 0.0, %v2350
  %v2352 = vpop.f32.mrf.mxu0
  %2353 = vdwg.mxu0
  %2354 = vmatpush.bf16.msra.mxu0 0
  %2355 = vmatpush.bf16.msra.mxu0 0
  %2356 = vmatpush.bf16.msra.mxu0 0
  %2357 = vmatpush.bf16.msra.mxu0 0
  %2358 = vmatpush.bf16.msra.mxu0 0
  %2359 = vmatpush.bf16.msra.mxu0 0
  %2360 = vmatpush.bf16.msra.mxu0 0
  %2361 = vmatpush.bf16.msra.mxu0 %v2327
  %2362 = vmatmul.bf16.gmra.mxu0 %v2321
  %v2363 = vpop.f32.mrf.mxu0
  %v2364 = vadd.f32 0.0, %v2363
  %v2365 = vpop.f32.mrf.mxu0
  %2366 = vdwg.mxu0
  %2367 = vmatpush.bf16.msra.mxu0 0
  %2368 = vmatpush.bf16.msra.mxu0 0
  %2369 = vmatpush.bf16.msra.mxu0 0
  %2370 = vmatpush.bf16.msra.mxu0 0
  %2371 = vmatpush.bf16.msra.mxu0 0
  %2372 = vmatpush.bf16.msra.mxu0 0
  %2373 = vmatpush.bf16.msra.mxu0 0
  %2374 = vmatpush.bf16.msra.mxu0 %v2330
  %2375 = vmatmul.bf16.gmra.mxu0 %v2321
  %v2376 = vpop.f32.mrf.mxu0
  %v2377 = vadd.f32 0.0, %v2376
  %v2378 = vpop.f32.mrf.mxu0
  %2379 = vdwg.mxu0
  %2380 = vmatpush.bf16.msra.mxu0 0
  %2381 = vmatpush.bf16.msra.mxu0 0
  %2382 = vmatpush.bf16.msra.mxu0 0
  %2383 = vmatpush.bf16.msra.mxu0 0
  %2384 = vmatpush.bf16.msra.mxu0 0
  %2385 = vmatpush.bf16.msra.mxu0 0
  %2386 = vmatpush.bf16.msra.mxu0 0
  %2387 = vmatpush.bf16.msra.mxu0 %v2333
  %2388 = vmatmul.bf16.gmra.mxu0 %v2321
  %v2389 = vpop.f32.mrf.mxu0
  %v2390 = vadd.f32 0.0, %v2389
  %v2391 = vpop.f32.mrf.mxu0
  %2392 = vdwg.mxu0
  %2393 = vmatpush.bf16.msra.mxu0 0
  %2394 = vmatpush.bf16.msra.mxu0 0
  %2395 = vmatpush.bf16.msra.mxu0 0
  %2396 = vmatpush.bf16.msra.mxu0 0
  %2397 = vmatpush.bf16.msra.mxu0 0
  %2398 = vmatpush.bf16.msra.mxu0 0
  %2399 = vmatpush.bf16.msra.mxu0 0
  %2400 = vmatpush.bf16.msra.mxu0 %v2336
  %2401 = vmatmul.bf16.gmra.mxu0 %v2321
  %v2402 = vpop.f32.mrf.mxu0
  %v2403 = vadd.f32 0.0, %v2402
  %v2404 = vpop.f32.mrf.mxu0
  %2405 = vdwg.mxu0
  %2406 = vmatpush.bf16.msra.mxu0 0
  %2407 = vmatpush.bf16.msra.mxu0 0
  %2408 = vmatpush.bf16.msra.mxu0 0
  %2409 = vmatpush.bf16.msra.mxu0 0
  %2410 = vmatpush.bf16.msra.mxu0 0
  %2411 = vmatpush.bf16.msra.mxu0 0
  %2412 = vmatpush.bf16.msra.mxu0 0
  %2413 = vmatpush.bf16.msra.mxu0 %v2339
  %2414 = vmatmul.bf16.gmra.mxu0 %v2321
  %v2415 = vpop.f32.mrf.mxu0
  %v2416 = vadd.f32 0.0, %v2415
  %v2417 = vpop.f32.mrf.mxu0
  %2418 = vdwg.mxu0
  %v2419 = vadd.f32 %v2292, %v2351
  %v2420 = vadd.f32 %v2293, %v2364
  %v2421 = vadd.f32 %v2294, %v2377
  %v2422 = vadd.f32 %v2295, %v2390
  %v2423 = vadd.f32 %v2296, %v2403
  %v2424 = vadd.f32 %v2297, %v2416
  %v2425 = vld [vmem:[%s6] sm:$0xff]
  %2427 = vset.pattern.permute.xlu0 0
  %2428 = vperm.xlu0 %2427, %v2425
  %v2429 = vpop.permute.xlu0 %2428
  %v2431 = vmul.f32 %v2419, %v2429
  %v2432 = vmul.f32 %v2420, %v2429
  %v2433 = vmul.f32 %v2421, %v2429
  %v2434 = vmul.f32 %v2422, %v2429
  %v2435 = vmul.f32 %v2423, %v2429
  %v2436 = vmul.f32 %v2424, %v2429
  %v2437 = vld [vmem:[%s7] sm:$0xff]
  %2439 = vset.pattern.permute.xlu0 0
  %2440 = vperm.xlu0 %2439, %v2437
  %v2441 = vpop.permute.xlu0 %2440
  %v2443 = vadd.f32 %v2431, %v2441
  %v2444 = vadd.f32 %v2432, %v2441
  %v2445 = vadd.f32 %v2433, %v2441
  %v2446 = vadd.f32 %v2434, %v2441
  %v2447 = vadd.f32 %v2435, %v2441
  %v2448 = vadd.f32 %v2436, %v2441
  %v2449 = vmax.f32 %v2443, 0.0
  %v2450 = vmax.f32 %v2444, 0.0
  %v2451 = vmax.f32 %v2445, 0.0
  %v2452 = vmax.f32 %v2446, 0.0
  %v2453 = vmax.f32 %v2447, 0.0
  %v2454 = vmax.f32 %v2448, 0.0
  %v2455 = vpack.c.bf16 %v2450, %v2449
  %v2456 = vpack.c.bf16 %v2452, %v2451
  %v2457 = vpack.c.bf16 %v2454, %v2453
  %2458 = vst [vmem:[%s8] sm:$0xff] %v2455
  %2459 = vst [vmem:[%s8 + $0x8] sm:$0xff] %v2456
  %2460 = vst [vmem:[%s8 + $0x10] sm:$0xff] %v2457
  // Predicated region
  $region34: #{double_conv_forward.1} parent=0 // pred_check
    _
  $region35: #{double_conv_forward.1} parent=0 // pred_check_branch
    %2462 = sbr.rel (0) target = $region37
  $region36: #{double_conv_forward.1} parent=0 // pred_region
    _
  $region37: #{double_conv_forward.1} parent=0 // pred_fallthru
    _
  // Predicated region
  $region38: #{double_conv_forward.1} parent=0 // pred_check
    _
  $region39: #{double_conv_forward.1} parent=0 // pred_check_branch
    %2464 = sbr.rel (0) target = $region41
  $region40: #{double_conv_forward.1} parent=0 // pred_region
    _
  $region41: #{double_conv_forward.1} parent=0 // pred_fallthru
    _

</llo_original>
